<compile_context>
chip_gen: v5e
topology: v5e:2x2
jax: 0.10.0
libtpu: 0.0.40
codegen_flags: <defaults>
</compile_context>

<pallas_src>
import jax
import jax.numpy as jnp
from jax.experimental import pallas as pl
from jax.experimental.pallas import tpu as pltpu

# Small, lane-aligned stand-ins for the module's shapes.
# INPUT_DIM = SEQ_LEN * NUM_CHANNELS (module uses 200*4=800; we use 64*4=256
# to stay small and 128-lane / 256-MXU aligned). HIDDEN_DIM matches the module.
NUM_CHANNELS = 4
SEQ_LEN = 64
INPUT_DIM = SEQ_LEN * NUM_CHANNELS        # 256
HIDDEN_DIM = 512
BATCH = 8
N_COUPLING_LAYERS = 4


def _realnvp_kernel(x_ref, mask_ref, w1_ref, b1_ref,
                    w2s_ref, b2s_ref, w2t_ref, b2t_ref,
                    z_ref, ld_ref):
    """One grid step == one coupling layer.

    x and log_det live in the resident output blocks across the whole grid;
    the layer-l weights are streamed in by the BlockSpec pipeline.
    """
    l = pl.program_id(0)

    @pl.when(l == 0)
    def _():
        z_ref[...] = x_ref[...]                 # seed the carried state
        ld_ref[...] = jnp.zeros_like(ld_ref)    # zero the log_det accumulator

    x = z_ref[...]                              # (B, D) carried state, f32
    mask = mask_ref[0]                          # (1, D)
    one_minus = 1.0 - mask

    x_masked = x * mask

    # Fused first Linear of BOTH MLPs: (B, D) @ (D, 2H) on the MXU
    # (bf16 inputs, f32 accumulation), then ReLU and split into s / t halves.
    h = jnp.dot(x_masked.astype(jnp.bfloat16), w1_ref[0],
                preferred_element_type=jnp.float32) + b1_ref[0]
    h = jnp.maximum(h, 0.0)
    hidden = w2s_ref.shape[1]
    h_s = h[:, :hidden].astype(jnp.bfloat16)
    h_t = h[:, hidden:].astype(jnp.bfloat16)

    # Second Linear of each MLP (cannot be fused: different LHS activations).
    s_raw = jnp.dot(h_s, w2s_ref[0], preferred_element_type=jnp.float32) + b2s_ref[0]
    t_raw = jnp.dot(h_t, w2t_ref[0], preferred_element_type=jnp.float32) + b2t_ref[0]

    s = jnp.tanh(s_raw) * one_minus
    t = t_raw * one_minus

    z_ref[...] = x_masked + one_minus * (x * jnp.exp(s) + t)
    ld_ref[...] += jnp.sum(s, axis=1, keepdims=True)


def realnvp_forward(x, masks, w1, b1, w2s, b2s, w2t, b2t):
    """Full RealNVP forward: one pallas_call, grid over coupling layers."""
    B, D = x.shape
    L, _, H2 = b1.shape
    H = w2s.shape[1]

    grid_spec = pltpu.PrefetchScalarGridSpec(
        num_scalar_prefetch=0,
        grid=(L,),
        in_specs=[
            pl.BlockSpec((B, D), lambda l: (0, 0)),         # x (resident)
            pl.BlockSpec((1, 1, D), lambda l: (l, 0, 0)),   # mask[l]
            pl.BlockSpec((1, D, H2), lambda l: (l, 0, 0)),  # w1 cat [scale|trans], bf16
            pl.BlockSpec((1, 1, H2), lambda l: (l, 0, 0)),  # b1 cat
            pl.BlockSpec((1, H, D), lambda l: (l, 0, 0)),   # w2 scale, bf16
            pl.BlockSpec((1, 1, D), lambda l: (l, 0, 0)),   # b2 scale
            pl.BlockSpec((1, H, D), lambda l: (l, 0, 0)),   # w2 translate, bf16
            pl.BlockSpec((1, 1, D), lambda l: (l, 0, 0)),   # b2 translate
        ],
        out_specs=(
            pl.BlockSpec((B, D), lambda l: (0, 0)),         # z (resident, carries x)
            pl.BlockSpec((B, 1), lambda l: (0, 0)),         # log_det accumulator
        ),
    )

    z, ld = pl.pallas_call(
        _realnvp_kernel,
        out_shape=(jax.ShapeDtypeStruct((B, D), jnp.float32),
                   jax.ShapeDtypeStruct((B, 1), jnp.float32)),
        grid_spec=grid_spec,
        compiler_params=pltpu.CompilerParams(
            dimension_semantics=("arbitrary",)),  # layer axis is a sequential carry
    )(x, masks, w1, b1, w2s, b2s, w2t, b2t)
    return z, ld[:, 0]


realnvp_forward_jit = jax.jit(realnvp_forward)


def make_masks(n_layers, dim):
    # Mirrors RealNVP._create_mask(i % 2):
    #   i odd  -> mask[::2] = 1, mask[1::2] = 0
    #   i even -> mask[::2] = 0, mask[1::2] = 1
    idx = jnp.arange(dim)
    rows = []
    for i in range(n_layers):
        if i % 2:
            m = (idx % 2 == 0)
        else:
            m = (idx % 2 == 1)
        rows.append(m.astype(jnp.float32).reshape(1, dim))
    return jnp.stack(rows, axis=0)                      # (L, 1, D)


def init_params(key, dim, hidden, n_layers):
    """Deterministic synthetic weights, stacked over layers.

    First-layer weights of the scale/translate nets are concatenated along the
    output dim; weight matrices are cast to bf16, biases stay f32.
    """
    w1, b1, w2s, b2s, w2t, b2t = [], [], [], [], [], []
    for _ in range(n_layers):
        key, *ks = jax.random.split(key, 9)
        w1s = 0.05 * jax.random.normal(ks[0], (dim, hidden), jnp.float32)
        b1s = 0.05 * jax.random.normal(ks[1], (1, hidden), jnp.float32)
        w2s_i = 0.05 * jax.random.normal(ks[2], (hidden, dim), jnp.float32)
        b2s_i = 0.05 * jax.random.normal(ks[3], (1, dim), jnp.float32)
        w1t = 0.05 * jax.random.normal(ks[4], (dim, hidden), jnp.float32)
        b1t = 0.05 * jax.random.normal(ks[5], (1, hidden), jnp.float32)
        w2t_i = 0.05 * jax.random.normal(ks[6], (hidden, dim), jnp.float32)
        b2t_i = 0.05 * jax.random.normal(ks[7], (1, dim), jnp.float32)
        w1.append(jnp.concatenate([w1s, w1t], axis=1))  # (D, 2H)
        b1.append(jnp.concatenate([b1s, b1t], axis=1))  # (1, 2H)
        w2s.append(w2s_i); b2s.append(b2s_i)
        w2t.append(w2t_i); b2t.append(b2t_i)
    return (jnp.stack(w1).astype(jnp.bfloat16),         # (L, D, 2H)
            jnp.stack(b1),                              # (L, 1, 2H)
            jnp.stack(w2s).astype(jnp.bfloat16),        # (L, H, D)
            jnp.stack(b2s),                             # (L, 1, D)
            jnp.stack(w2t).astype(jnp.bfloat16),        # (L, H, D)
            jnp.stack(b2t))                             # (L, 1, D)


def realnvp_reference(x, masks, w1, b1, w2s, b2s, w2t, b2t):
    """Pure-JAX reference mirroring the PyTorch module semantics (same bf16
    weights / casts as the kernel so the comparison is apples-to-apples)."""
    L = masks.shape[0]
    H = w2s.shape[1]
    log_det = jnp.zeros((x.shape[0],), jnp.float32)
    for i in range(L):
        mask = masks[i]
        one_minus = 1.0 - mask
        xm = x * mask
        h = jnp.dot(xm.astype(jnp.bfloat16), w1[i],
                    preferred_element_type=jnp.float32) + b1[i]
        h = jnp.maximum(h, 0.0)
        s = jnp.tanh(jnp.dot(h[:, :H].astype(jnp.bfloat16), w2s[i],
                             preferred_element_type=jnp.float32) + b2s[i]) * one_minus
        t = (jnp.dot(h[:, H:].astype(jnp.bfloat16), w2t[i],
                     preferred_element_type=jnp.float32) + b2t[i]) * one_minus
        x = xm + one_minus * (x * jnp.exp(s) + t)
        log_det = log_det + jnp.sum(s, axis=1)
    return x, log_det


if __name__ == "__main__":
    key = jax.random.PRNGKey(0)
    key_x, key_p = jax.random.split(key)

    x = jax.random.normal(key_x, (BATCH, INPUT_DIM), jnp.float32)
    masks = make_masks(N_COUPLING_LAYERS, INPUT_DIM)
    params = init_params(key_p, INPUT_DIM, HIDDEN_DIM, N_COUPLING_LAYERS)

    z, log_det = realnvp_forward_jit(x, masks, *params)
    z = jax.block_until_ready(z)
    log_det = jax.block_until_ready(log_det)

    z_ref, ld_ref = realnvp_reference(x, masks, *params)
    assert z.shape == (BATCH, INPUT_DIM) and log_det.shape == (BATCH,)
    # bf16 weights -> slightly looser tolerance than the pure-f32 version.
    assert jnp.allclose(z, z_ref, atol=1e-3, rtol=1e-3), \
        float(jnp.max(jnp.abs(z - z_ref)))
    assert jnp.allclose(log_det, ld_ref, atol=1e-3, rtol=1e-3), \
        float(jnp.max(jnp.abs(log_det - ld_ref)))

    # TODO(synk): RealNVP.log_prob's base-distribution term and
    # CouplingLayer.inverse are outside the requested forward pass.
    print("KERNEL_OK")
</pallas_src>

<mosaic_0001>
module attributes {stable_mosaic.version = 11 : i64} {
  func.func @_realnvp_kernel(%arg0: i32, %arg1: memref<8x256xf32, #tpu.memory_space<vmem>>, %arg2: memref<1x1x256xf32, #tpu.memory_space<vmem>>, %arg3: memref<1x256x1024xbf16, #tpu.memory_space<vmem>>, %arg4: memref<1x1x1024xf32, #tpu.memory_space<vmem>>, %arg5: memref<1x512x256xbf16, #tpu.memory_space<vmem>>, %arg6: memref<1x1x256xf32, #tpu.memory_space<vmem>>, %arg7: memref<1x512x256xbf16, #tpu.memory_space<vmem>>, %arg8: memref<1x1x256xf32, #tpu.memory_space<vmem>>, %arg9: memref<8x256xf32, #tpu.memory_space<vmem>>, %arg10: memref<8x1xf32, #tpu.memory_space<vmem>>) attributes {dimension_semantics = [#tpu.dimension_semantics<arbitrary>], iteration_bounds = array<i64: 4>, scalar_prefetch = 0 : i64, scratch_operands = 0 : i64, tpu.core_type = #tpu.core_type<tc>, window_params = [{pipeline_mode = #tpu.pipeline_mode<synchronous>, transform_indices = @transform_0, window_bounds = array<i64: 8, 256>}, {transform_indices = @transform_1, window_bounds = array<i64: 1, 1, 256>}, {transform_indices = @transform_2, window_bounds = array<i64: 1, 256, 1024>}, {transform_indices = @transform_3, window_bounds = array<i64: 1, 1, 1024>}, {transform_indices = @transform_4, window_bounds = array<i64: 1, 512, 256>}, {transform_indices = @transform_5, window_bounds = array<i64: 1, 1, 256>}, {transform_indices = @transform_6, window_bounds = array<i64: 1, 512, 256>}, {transform_indices = @transform_7, window_bounds = array<i64: 1, 1, 256>}, {pipeline_mode = #tpu.pipeline_mode<synchronous>, transform_indices = @transform_8, window_bounds = array<i64: 8, 256>}, {pipeline_mode = #tpu.pipeline_mode<synchronous>, transform_indices = @transform_9, window_bounds = array<i64: 8, 1>}]} {
    %c0_i32 = arith.constant 0 : i32
    %0 = arith.cmpi eq, %arg0, %c0_i32 : i32
    %1 = arith.extui %0 : i1 to i32
    %c0_i32_0 = arith.constant 0 : i32
    %2 = arith.cmpi ne, %1, %c0_i32_0 : i32
    scf.if %2 {
      %c0_34 = arith.constant 0 : index
      %c0_35 = arith.constant 0 : index
      %55 = vector.load %arg1[%c0_34, %c0_35] : memref<8x256xf32, #tpu.memory_space<vmem>>, vector<8x256xf32>
      %c0_36 = arith.constant 0 : index
      %c0_37 = arith.constant 0 : index
      %56 = vector.load %arg9[%c0_36, %c0_37] : memref<8x256xf32, #tpu.memory_space<vmem>>, vector<8x256xf32>
      tpu.vector_store %arg9[%c0_36, %c0_37], %55 {strides = array<i32>} : memref<8x256xf32, #tpu.memory_space<vmem>>, vector<8x256xf32>,
      %cst_38 = arith.constant 0.000000e+00 : f32
      %57 = vector.broadcast %cst_38 : f32 to vector<8x1xf32>
      %c0_39 = arith.constant 0 : index
      %c0_40 = arith.constant 0 : index
      %58 = vector.load %arg10[%c0_39, %c0_40] : memref<8x1xf32, #tpu.memory_space<vmem>>, vector<8x1xf32>
      tpu.vector_store %arg10[%c0_39, %c0_40], %57 {strides = array<i32>} : memref<8x1xf32, #tpu.memory_space<vmem>>, vector<8x1xf32>,
    } else {
    }
    %c0 = arith.constant 0 : index
    %c0_1 = arith.constant 0 : index
    %3 = vector.load %arg9[%c0, %c0_1] : memref<8x256xf32, #tpu.memory_space<vmem>>, vector<8x256xf32>
    %c0_2 = arith.constant 0 : index
    %c0_3 = arith.constant 0 : index
    %c0_4 = arith.constant 0 : index
    %4 = vector.load %arg2[%c0_2, %c0_3, %c0_4] : memref<1x1x256xf32, #tpu.memory_space<vmem>>, vector<1x1x256xf32>
    %5 = vector.shape_cast %4 : vector<1x1x256xf32> to vector<1x256xf32>
    %cst = arith.constant 1.000000e+00 : f32
    %6 = vector.broadcast %cst : f32 to vector<1x256xf32>
    %7 = arith.subf %6, %5 : vector<1x256xf32>
    %8 = vector.broadcast %5 : vector<1x256xf32> to vector<8x256xf32>
    %9 = arith.mulf %3, %8 : vector<8x256xf32>
    %10 = arith.truncf %9 : vector<8x256xf32> to vector<8x256xbf16>
    %c0_5 = arith.constant 0 : index
    %c0_6 = arith.constant 0 : index
    %c0_7 = arith.constant 0 : index
    %11 = vector.load %arg3[%c0_5, %c0_6, %c0_7] : memref<1x256x1024xbf16, #tpu.memory_space<vmem>>, vector<1x256x1024xbf16>
    %12 = vector.shape_cast %11 : vector<1x256x1024xbf16> to vector<256x1024xbf16>
    %cst_8 = arith.constant dense<0.000000e+00> : vector<8x1024xf32>
    %13 = tpu.matmul %10, %12, %cst_8 {dimension_numbers = #tpu.dot_dimension_numbers<[1], [0], [0], [1], [0, 0, 1, 1], [], []>} : vector<8x256xbf16>, vector<256x1024xbf16>, vector<8x1024xf32> -> vector<8x1024xf32>
    %c0_9 = arith.constant 0 : index
    %c0_10 = arith.constant 0 : index
    %c0_11 = arith.constant 0 : index
    %14 = vector.load %arg4[%c0_9, %c0_10, %c0_11] : memref<1x1x1024xf32, #tpu.memory_space<vmem>>, vector<1x1x1024xf32>
    %15 = vector.shape_cast %14 : vector<1x1x1024xf32> to vector<1x1024xf32>
    %16 = vector.broadcast %15 : vector<1x1024xf32> to vector<8x1024xf32>
    %17 = arith.addf %13, %16 : vector<8x1024xf32>
    %cst_12 = arith.constant 0.000000e+00 : f32
    %18 = vector.broadcast %cst_12 : f32 to vector<8x1024xf32>
    %19 = arith.maximumf %17, %18 : vector<8x1024xf32>
    %20 = vector.extract_strided_slice %19 {offsets = [0, 0], sizes = [8, 512], strides = [1, 1]} : vector<8x1024xf32> to vector<8x512xf32>
    %21 = arith.truncf %20 : vector<8x512xf32> to vector<8x512xbf16>
    %22 = vector.extract_strided_slice %19 {offsets = [0, 512], sizes = [8, 512], strides = [1, 1]} : vector<8x1024xf32> to vector<8x512xf32>
    %23 = arith.truncf %22 : vector<8x512xf32> to vector<8x512xbf16>
    %c0_13 = arith.constant 0 : index
    %c0_14 = arith.constant 0 : index
    %c0_15 = arith.constant 0 : index
    %24 = vector.load %arg5[%c0_13, %c0_14, %c0_15] : memref<1x512x256xbf16, #tpu.memory_space<vmem>>, vector<1x512x256xbf16>
    %25 = vector.shape_cast %24 : vector<1x512x256xbf16> to vector<512x256xbf16>
    %cst_16 = arith.constant dense<0.000000e+00> : vector<8x256xf32>
    %26 = tpu.matmul %21, %25, %cst_16 {dimension_numbers = #tpu.dot_dimension_numbers<[1], [0], [0], [1], [0, 0, 1, 1], [], []>} : vector<8x512xbf16>, vector<512x256xbf16>, vector<8x256xf32> -> vector<8x256xf32>
    %c0_17 = arith.constant 0 : index
    %c0_18 = arith.constant 0 : index
    %c0_19 = arith.constant 0 : index
    %27 = vector.load %arg6[%c0_17, %c0_18, %c0_19] : memref<1x1x256xf32, #tpu.memory_space<vmem>>, vector<1x1x256xf32>
    %28 = vector.shape_cast %27 : vector<1x1x256xf32> to vector<1x256xf32>
    %29 = vector.broadcast %28 : vector<1x256xf32> to vector<8x256xf32>
    %30 = arith.addf %26, %29 : vector<8x256xf32>
    %c0_20 = arith.constant 0 : index
    %c0_21 = arith.constant 0 : index
    %c0_22 = arith.constant 0 : index
    %31 = vector.load %arg7[%c0_20, %c0_21, %c0_22] : memref<1x512x256xbf16, #tpu.memory_space<vmem>>, vector<1x512x256xbf16>
    %32 = vector.shape_cast %31 : vector<1x512x256xbf16> to vector<512x256xbf16>
    %cst_23 = arith.constant dense<0.000000e+00> : vector<8x256xf32>
    %33 = tpu.matmul %23, %32, %cst_23 {dimension_numbers = #tpu.dot_dimension_numbers<[1], [0], [0], [1], [0, 0, 1, 1], [], []>} : vector<8x512xbf16>, vector<512x256xbf16>, vector<8x256xf32> -> vector<8x256xf32>
    %c0_24 = arith.constant 0 : index
    %c0_25 = arith.constant 0 : index
    %c0_26 = arith.constant 0 : index
    %34 = vector.load %arg8[%c0_24, %c0_25, %c0_26] : memref<1x1x256xf32, #tpu.memory_space<vmem>>, vector<1x1x256xf32>
    %35 = vector.shape_cast %34 : vector<1x1x256xf32> to vector<1x256xf32>
    %36 = vector.broadcast %35 : vector<1x256xf32> to vector<8x256xf32>
    %37 = arith.addf %33, %36 : vector<8x256xf32>
    %38 = math.tanh %30 : vector<8x256xf32>
    %39 = vector.broadcast %7 : vector<1x256xf32> to vector<8x256xf32>
    %40 = arith.mulf %38, %39 : vector<8x256xf32>
    %41 = vector.broadcast %7 : vector<1x256xf32> to vector<8x256xf32>
    %42 = arith.mulf %37, %41 : vector<8x256xf32>
    %43 = math.exp %40 : vector<8x256xf32>
    %44 = arith.mulf %3, %43 : vector<8x256xf32>
    %45 = arith.addf %44, %42 : vector<8x256xf32>
    %46 = vector.broadcast %7 : vector<1x256xf32> to vector<8x256xf32>
    %47 = arith.mulf %46, %45 : vector<8x256xf32>
    %48 = arith.addf %9, %47 : vector<8x256xf32>
    %c0_27 = arith.constant 0 : index
    %c0_28 = arith.constant 0 : index
    %49 = vector.load %arg9[%c0_27, %c0_28] : memref<8x256xf32, #tpu.memory_space<vmem>>, vector<8x256xf32>
    tpu.vector_store %arg9[%c0_27, %c0_28], %48 {strides = array<i32>} : memref<8x256xf32, #tpu.memory_space<vmem>>, vector<8x256xf32>,
    %c0_29 = arith.constant 0 : index
    %c0_30 = arith.constant 0 : index
    %50 = vector.load %arg10[%c0_29, %c0_30] : memref<8x1xf32, #tpu.memory_space<vmem>>, vector<8x1xf32>
    %cst_31 = arith.constant dense<0.000000e+00> : vector<8xf32>
    %51 = vector.multi_reduction <add>, %40, %cst_31 [1] : vector<8x256xf32> to vector<8xf32>
    %52 = vector.shape_cast %51 : vector<8xf32> to vector<8x1xf32>
    %53 = arith.addf %50, %52 : vector<8x1xf32>
    %c0_32 = arith.constant 0 : index
    %c0_33 = arith.constant 0 : index
    %54 = vector.load %arg10[%c0_32, %c0_33] : memref<8x1xf32, #tpu.memory_space<vmem>>, vector<8x1xf32>
    tpu.vector_store %arg10[%c0_32, %c0_33], %53 {strides = array<i32>} : memref<8x1xf32, #tpu.memory_space<vmem>>, vector<8x1xf32>,
    return
  }
  func.func @transform_0(%arg0: i32) -> (i32, i32) {
    %c0_i32 = arith.constant 0 : i32
    %c0_i32_0 = arith.constant 0 : i32
    %c0_i32_1 = arith.constant 0 : i32
    return %c0_i32, %c0_i32_0 : i32, i32
  }
  func.func @transform_1(%arg0: i32) -> (i32, i32, i32) {
    %c0_i32 = arith.constant 0 : i32
    %c0_i32_0 = arith.constant 0 : i32
    %c0_i32_1 = arith.constant 0 : i32
    return %arg0, %c0_i32, %c0_i32_0 : i32, i32, i32
  }
  func.func @transform_2(%arg0: i32) -> (i32, i32, i32) {
    %c0_i32 = arith.constant 0 : i32
    %c0_i32_0 = arith.constant 0 : i32
    %c0_i32_1 = arith.constant 0 : i32
    return %arg0, %c0_i32, %c0_i32_0 : i32, i32, i32
  }
  func.func @transform_3(%arg0: i32) -> (i32, i32, i32) {
    %c0_i32 = arith.constant 0 : i32
    %c0_i32_0 = arith.constant 0 : i32
    %c0_i32_1 = arith.constant 0 : i32
    return %arg0, %c0_i32, %c0_i32_0 : i32, i32, i32
  }
  func.func @transform_4(%arg0: i32) -> (i32, i32, i32) {
    %c0_i32 = arith.constant 0 : i32
    %c0_i32_0 = arith.constant 0 : i32
    %c0_i32_1 = arith.constant 0 : i32
    return %arg0, %c0_i32, %c0_i32_0 : i32, i32, i32
  }
  func.func @transform_5(%arg0: i32) -> (i32, i32, i32) {
    %c0_i32 = arith.constant 0 : i32
    %c0_i32_0 = arith.constant 0 : i32
    %c0_i32_1 = arith.constant 0 : i32
    return %arg0, %c0_i32, %c0_i32_0 : i32, i32, i32
  }
  func.func @transform_6(%arg0: i32) -> (i32, i32, i32) {
    %c0_i32 = arith.constant 0 : i32
    %c0_i32_0 = arith.constant 0 : i32
    %c0_i32_1 = arith.constant 0 : i32
    return %arg0, %c0_i32, %c0_i32_0 : i32, i32, i32
  }
  func.func @transform_7(%arg0: i32) -> (i32, i32, i32) {
    %c0_i32 = arith.constant 0 : i32
    %c0_i32_0 = arith.constant 0 : i32
    %c0_i32_1 = arith.constant 0 : i32
    return %arg0, %c0_i32, %c0_i32_0 : i32, i32, i32
  }
  func.func @transform_8(%arg0: i32) -> (i32, i32) {
    %c0_i32 = arith.constant 0 : i32
    %c0_i32_0 = arith.constant 0 : i32
    %c0_i32_1 = arith.constant 0 : i32
    return %c0_i32, %c0_i32_0 : i32, i32
  }
  func.func @transform_9(%arg0: i32) -> (i32, i32) {
    %c0_i32 = arith.constant 0 : i32
    %c0_i32_0 = arith.constant 0 : i32
    %c0_i32_1 = arith.constant 0 : i32
    return %c0_i32, %c0_i32_0 : i32, i32
  }
}

</mosaic_0001>

<llo_original>
// kernel: realnvp_forward.1
$region0: #{realnvp_forward.1}
  #allocation0 [shape = 'u32[]', space=smem, size = 0x4, offset = 0x4, fixed_abs, tag = 'smem constant byte address 0x4 - core index']
  #allocation1 [shape = 'u32[72,128]{1,0:T(1,128)}', space=vmem, size = 0x9000, scoped, tag = 'internal scratch']
  %s0 = inlined_call_operand.hbm [shape: f32[8,256], index: 0, kind: input, shape index: {}]
  %s1 = inlined_call_operand.hbm [shape: f32[4,1,256], index: 1, kind: input, shape index: {}]
  %s2 = inlined_call_operand.hbm [shape: bf16[4,256,1024], index: 2, kind: input, shape index: {}]
  %s3 = inlined_call_operand.hbm [shape: f32[4,1,1024], index: 3, kind: input, shape index: {}]
  %s4 = inlined_call_operand.hbm [shape: bf16[4,512,256], index: 4, kind: input, shape index: {}]
  %s5 = inlined_call_operand.hbm [shape: f32[4,1,256], index: 5, kind: input, shape index: {}]
  %s6 = inlined_call_operand.hbm [shape: bf16[4,512,256], index: 6, kind: input, shape index: {}]
  %s7 = inlined_call_operand.hbm [shape: f32[4,1,256], index: 7, kind: input, shape index: {}]
  %s8 = inlined_call_operand.hbm [shape: f32[8,256], index: 8, kind: output, shape index: {0}]
  %s9 = inlined_call_operand.vmem [shape: f32[8,1], index: 9, kind: output, shape index: {1}]
  %10 = xla_tuple %s8, %s9
  %s11 = sld [smem:[#allocation0]]
  $region109: #{realnvp_forward.1} parent=0
    _
  %s13 = ssub.s32 1, %s11
  %s14 = scalar_select 0, %s13, %s11
  $region1: #{realnvp_forward.1} parent=0
    #allocation2 [shape = 'u8[8192]{0}', space=vmem, size = 0x2000, scoped, tag = 'input window, operand 0, single buffered']
    #allocation3 [shape = 's32[2]{0}', space=sflag, size = 0x8, scoped, tag = 'scoped memory for realnvp_forward.1']
    #allocation4 [shape = 's32[2]{0}', space=sflag, size = 0x8, scoped, tag = 'scoped memory for realnvp_forward.1']
    #allocation5 [shape = 'u8[2048]{0}', space=vmem, size = 0x800, scoped, tag = 'input window, operand 1']
    #allocation6 [shape = 's32[2]{0}', space=sflag, size = 0x8, scoped, tag = 'scoped memory for realnvp_forward.1']
    #allocation7 [shape = 'u8[1048576]{0}', space=vmem, size = 0x100000, scoped, tag = 'input window, operand 2']
    #allocation8 [shape = 'u8[8192]{0}', space=vmem, size = 0x2000, scoped, tag = 'input window, operand 3']
    #allocation9 [shape = 's32[2]{0}', space=sflag, size = 0x8, scoped, tag = 'scoped memory for realnvp_forward.1']
    #allocation10 [shape = 'u8[524288]{0}', space=vmem, size = 0x80000, scoped, tag = 'input window, operand 4']
    #allocation11 [shape = 'u8[2048]{0}', space=vmem, size = 0x800, scoped, tag = 'input window, operand 5']
    #allocation12 [shape = 's32[2]{0}', space=sflag, size = 0x8, scoped, tag = 'scoped memory for realnvp_forward.1']
    #allocation13 [shape = 'u8[524288]{0}', space=vmem, size = 0x80000, scoped, tag = 'input window, operand 6']
    #allocation14 [shape = 'u8[2048]{0}', space=vmem, size = 0x800, scoped, tag = 'input window, operand 7']
    #allocation15 [shape = 's32[2]{0}', space=sflag, size = 0x8, scoped, tag = 'scoped memory for realnvp_forward.1']
    #allocation16 [shape = 'u8[8192]{0}', space=vmem, size = 0x2000, scoped, tag = 'output window, operand 0, single buffered']
    %15 = vsyncpa [#allocation3], 0
    %16 = vsyncpa [#allocation6], 0
    %s17 = scalar_lea.sflag [#allocation6], 1
    %18 = vsyncpa %s17, 0
    %19 = vsyncpa [#allocation9], 0
    %s20 = scalar_lea.sflag [#allocation9], 1
    %21 = vsyncpa %s20, 0
    %22 = vsyncpa [#allocation12], 0
    %s23 = scalar_lea.sflag [#allocation12], 1
    %24 = vsyncpa %s23, 0
    %25 = vsyncpa [#allocation15], 0
    %s26 = scalar_lea.sflag [#allocation15], 1
    %27 = vsyncpa %s26, 0
    %28 = vsyncpa [#allocation4], 0
    loop: start=0, step=1, limit=6
    $region2: #{realnvp_forward.1} parent=1 // loop_pre_header
      _
    $region3: #{realnvp_forward.1} parent=1 // loop_header
      %s30 = sphi 0, %s34
      %p31 = scmp.ge.s32.totalorder %s30, 6
      %s38 = sphi 0, %s38
      %s40 = sphi 0, %s38
      %s41 = sphi 0, %s40
      %s55 = sphi 0, %s41
      %s61 = sphi 0, %s63
      %s64 = sphi 0, %s61
      %s65 = sphi 0, %s64
      %s81 = sphi 0, %s65
      %s87 = sphi 0, %s89
      %s90 = sphi 0, %s87
      %s91 = sphi 0, %s90
      %s107 = sphi 0, %s91
      %s113 = sphi 0, %s115
      %s116 = sphi 0, %s113
      %s117 = sphi 0, %s116
      %s133 = sphi 0, %s117
      %s139 = sphi 0, %s141
      %s142 = sphi 0, %s139
      %s143 = sphi 0, %s142
      %s159 = sphi 0, %s143
      %s165 = sphi 0, %s167
      %s168 = sphi 0, %s165
      %s169 = sphi 0, %s168
      %s185 = sphi 0, %s169
      %s191 = sphi 0, %s193
      %s194 = sphi 0, %s191
      %s195 = sphi 0, %s194
      %s211 = sphi 0, %s195
      %s217 = sphi 0, %s219
      %s220 = sphi 0, %s217
      %s221 = sphi 0, %s220
      %s237 = sphi 0, %s221
      %s241 = sphi 0, %s241
      %s243 = sphi 0, %s241
      %s244 = sphi 0, %s243
      %s258 = sphi 0, %s244
      %s262 = sphi 0, %s262
      %s264 = sphi 0, %s262
      %s265 = sphi 0, %s264
      %s279 = sphi 0, %s265
    $region4: #{realnvp_forward.1} parent=1 // loop_header_branch
      %33 = sbr.rel (%p31) target = $region8
    $region5: #{realnvp_forward.1} parent=1 // loop_body
      %s35 = ssub.s32 %s30, 1
      %s36 = ssub.s32 %s30, 2
      %s37 = sadd.s32 %s30, 1
      %s39 = sadd.s32 %s38, 1
      %p42 = scmp.eq.s32.totalorder %s30, 3
      %p43 = scmp.ne.s32.totalorder %s38, %s40
      %p44 = scmp.eq.s32.totalorder %s30, 0
      %p45 = por %p43, %p44
      %p46 = scmp.ne.s32.totalorder %s38, %s40
      %p47 = scmp.eq.s32.totalorder %s35, 3
      %p48 = por %p46, %p47
      %p49 = scmp.ne.s32.totalorder %s40, %s41
      %p50 = scmp.eq.s32.totalorder %s35, 0
      %p51 = por %p49, %p50
      %p52 = scmp.ne.s32.totalorder %s40, %s41
      %p53 = scmp.eq.s32.totalorder %s36, 3
      %p54 = por %p52, %p53
      %p56 = scmp.ne.s32.totalorder %s41, %s55
      %p57 = scmp.eq.s32.totalorder %s36, 0
      %p58 = por %p56, %p57
      %s59 = ssub.s32 %s30, %s37
      %p60 = scmp.eq.s32.totalorder %s59, 0
      %s62 = sadd.s32 %s61, 1
      %s63 = scalar_select %p60, %s61, %s62
      %p66 = pneg %p60
      %p67 = scmp.eq.s32.totalorder %s30, 3
      %p68 = por %p66, %p67
      %p69 = scmp.ne.s32.totalorder %s61, %s64
      %p70 = scmp.eq.s32.totalorder %s30, 0
      %p71 = por %p69, %p70
      %p72 = scmp.ne.s32.totalorder %s61, %s64
      %p73 = scmp.eq.s32.totalorder %s35, 3
      %p74 = por %p72, %p73
      %p75 = scmp.ne.s32.totalorder %s64, %s65
      %p76 = scmp.eq.s32.totalorder %s35, 0
      %p77 = por %p75, %p76
      %p78 = scmp.ne.s32.totalorder %s64, %s65
      %p79 = scmp.eq.s32.totalorder %s36, 3
      %p80 = por %p78, %p79
      %p82 = scmp.ne.s32.totalorder %s65, %s81
      %p83 = scmp.eq.s32.totalorder %s36, 0
      %p84 = por %p82, %p83
      %s85 = ssub.s32 %s30, %s37
      %p86 = scmp.eq.s32.totalorder %s85, 0
      %s88 = sadd.s32 %s87, 1
      %s89 = scalar_select %p86, %s87, %s88
      %p92 = pneg %p86
      %p93 = scmp.eq.s32.totalorder %s30, 3
      %p94 = por %p92, %p93
      %p95 = scmp.ne.s32.totalorder %s87, %s90
      %p96 = scmp.eq.s32.totalorder %s30, 0
      %p97 = por %p95, %p96
      %p98 = scmp.ne.s32.totalorder %s87, %s90
      %p99 = scmp.eq.s32.totalorder %s35, 3
      %p100 = por %p98, %p99
      %p101 = scmp.ne.s32.totalorder %s90, %s91
      %p102 = scmp.eq.s32.totalorder %s35, 0
      %p103 = por %p101, %p102
      %p104 = scmp.ne.s32.totalorder %s90, %s91
      %p105 = scmp.eq.s32.totalorder %s36, 3
      %p106 = por %p104, %p105
      %p108 = scmp.ne.s32.totalorder %s91, %s107
      %p109 = scmp.eq.s32.totalorder %s36, 0
      %p110 = por %p108, %p109
      %s111 = ssub.s32 %s30, %s37
      %p112 = scmp.eq.s32.totalorder %s111, 0
      %s114 = sadd.s32 %s113, 1
      %s115 = scalar_select %p112, %s113, %s114
      %p118 = pneg %p112
      %p119 = scmp.eq.s32.totalorder %s30, 3
      %p120 = por %p118, %p119
      %p121 = scmp.ne.s32.totalorder %s113, %s116
      %p122 = scmp.eq.s32.totalorder %s30, 0
      %p123 = por %p121, %p122
      %p124 = scmp.ne.s32.totalorder %s113, %s116
      %p125 = scmp.eq.s32.totalorder %s35, 3
      %p126 = por %p124, %p125
      %p127 = scmp.ne.s32.totalorder %s116, %s117
      %p128 = scmp.eq.s32.totalorder %s35, 0
      %p129 = por %p127, %p128
      %p130 = scmp.ne.s32.totalorder %s116, %s117
      %p131 = scmp.eq.s32.totalorder %s36, 3
      %p132 = por %p130, %p131
      %p134 = scmp.ne.s32.totalorder %s117, %s133
      %p135 = scmp.eq.s32.totalorder %s36, 0
      %p136 = por %p134, %p135
      %s137 = ssub.s32 %s30, %s37
      %p138 = scmp.eq.s32.totalorder %s137, 0
      %s140 = sadd.s32 %s139, 1
      %s141 = scalar_select %p138, %s139, %s140
      %p144 = pneg %p138
      %p145 = scmp.eq.s32.totalorder %s30, 3
      %p146 = por %p144, %p145
      %p147 = scmp.ne.s32.totalorder %s139, %s142
      %p148 = scmp.eq.s32.totalorder %s30, 0
      %p149 = por %p147, %p148
      %p150 = scmp.ne.s32.totalorder %s139, %s142
      %p151 = scmp.eq.s32.totalorder %s35, 3
      %p152 = por %p150, %p151
      %p153 = scmp.ne.s32.totalorder %s142, %s143
      %p154 = scmp.eq.s32.totalorder %s35, 0
      %p155 = por %p153, %p154
      %p156 = scmp.ne.s32.totalorder %s142, %s143
      %p157 = scmp.eq.s32.totalorder %s36, 3
      %p158 = por %p156, %p157
      %p160 = scmp.ne.s32.totalorder %s143, %s159
      %p161 = scmp.eq.s32.totalorder %s36, 0
      %p162 = por %p160, %p161
      %s163 = ssub.s32 %s30, %s37
      %p164 = scmp.eq.s32.totalorder %s163, 0
      %s166 = sadd.s32 %s165, 1
      %s167 = scalar_select %p164, %s165, %s166
      %p170 = pneg %p164
      %p171 = scmp.eq.s32.totalorder %s30, 3
      %p172 = por %p170, %p171
      %p173 = scmp.ne.s32.totalorder %s165, %s168
      %p174 = scmp.eq.s32.totalorder %s30, 0
      %p175 = por %p173, %p174
      %p176 = scmp.ne.s32.totalorder %s165, %s168
      %p177 = scmp.eq.s32.totalorder %s35, 3
      %p178 = por %p176, %p177
      %p179 = scmp.ne.s32.totalorder %s168, %s169
      %p180 = scmp.eq.s32.totalorder %s35, 0
      %p181 = por %p179, %p180
      %p182 = scmp.ne.s32.totalorder %s168, %s169
      %p183 = scmp.eq.s32.totalorder %s36, 3
      %p184 = por %p182, %p183
      %p186 = scmp.ne.s32.totalorder %s169, %s185
      %p187 = scmp.eq.s32.totalorder %s36, 0
      %p188 = por %p186, %p187
      %s189 = ssub.s32 %s30, %s37
      %p190 = scmp.eq.s32.totalorder %s189, 0
      %s192 = sadd.s32 %s191, 1
      %s193 = scalar_select %p190, %s191, %s192
      %p196 = pneg %p190
      %p197 = scmp.eq.s32.totalorder %s30, 3
      %p198 = por %p196, %p197
      %p199 = scmp.ne.s32.totalorder %s191, %s194
      %p200 = scmp.eq.s32.totalorder %s30, 0
      %p201 = por %p199, %p200
      %p202 = scmp.ne.s32.totalorder %s191, %s194
      %p203 = scmp.eq.s32.totalorder %s35, 3
      %p204 = por %p202, %p203
      %p205 = scmp.ne.s32.totalorder %s194, %s195
      %p206 = scmp.eq.s32.totalorder %s35, 0
      %p207 = por %p205, %p206
      %p208 = scmp.ne.s32.totalorder %s194, %s195
      %p209 = scmp.eq.s32.totalorder %s36, 3
      %p210 = por %p208, %p209
      %p212 = scmp.ne.s32.totalorder %s195, %s211
      %p213 = scmp.eq.s32.totalorder %s36, 0
      %p214 = por %p212, %p213
      %s215 = ssub.s32 %s30, %s37
      %p216 = scmp.eq.s32.totalorder %s215, 0
      %s218 = sadd.s32 %s217, 1
      %s219 = scalar_select %p216, %s217, %s218
      %p222 = pneg %p216
      %p223 = scmp.eq.s32.totalorder %s30, 3
      %p224 = por %p222, %p223
      %p225 = scmp.ne.s32.totalorder %s217, %s220
      %p226 = scmp.eq.s32.totalorder %s30, 0
      %p227 = por %p225, %p226
      %p228 = scmp.ne.s32.totalorder %s217, %s220
      %p229 = scmp.eq.s32.totalorder %s35, 3
      %p230 = por %p228, %p229
      %p231 = scmp.ne.s32.totalorder %s220, %s221
      %p232 = scmp.eq.s32.totalorder %s35, 0
      %p233 = por %p231, %p232
      %p234 = scmp.ne.s32.totalorder %s220, %s221
      %p235 = scmp.eq.s32.totalorder %s36, 3
      %p236 = por %p234, %p235
      %p238 = scmp.ne.s32.totalorder %s221, %s237
      %p239 = scmp.eq.s32.totalorder %s36, 0
      %p240 = por %p238, %p239
      %s242 = sadd.s32 %s241, 1
      %p245 = scmp.eq.s32.totalorder %s30, 3
      %p246 = scmp.ne.s32.totalorder %s241, %s243
      %p247 = scmp.eq.s32.totalorder %s30, 0
      %p248 = por %p246, %p247
      %p249 = scmp.ne.s32.totalorder %s241, %s243
      %p250 = scmp.eq.s32.totalorder %s35, 3
      %p251 = por %p249, %p250
      %p252 = scmp.ne.s32.totalorder %s243, %s244
      %p253 = scmp.eq.s32.totalorder %s35, 0
      %p254 = por %p252, %p253
      %p255 = scmp.ne.s32.totalorder %s243, %s244
      %p256 = scmp.eq.s32.totalorder %s36, 3
      %p257 = por %p255, %p256
      %p259 = scmp.ne.s32.totalorder %s244, %s258
      %p260 = scmp.eq.s32.totalorder %s36, 0
      %p261 = por %p259, %p260
      %s263 = sadd.s32 %s262, 1
      %p266 = scmp.eq.s32.totalorder %s30, 3
      %p267 = scmp.ne.s32.totalorder %s262, %s264
      %p268 = scmp.eq.s32.totalorder %s30, 0
      %p269 = por %p267, %p268
      %p270 = scmp.ne.s32.totalorder %s262, %s264
      %p271 = scmp.eq.s32.totalorder %s35, 3
      %p272 = por %p270, %p271
      %p273 = scmp.ne.s32.totalorder %s264, %s265
      %p274 = scmp.eq.s32.totalorder %s35, 0
      %p275 = por %p273, %p274
      %p276 = scmp.ne.s32.totalorder %s264, %s265
      %p277 = scmp.eq.s32.totalorder %s36, 3
      %p278 = por %p276, %p277
      %p280 = scmp.ne.s32.totalorder %s265, %s279
      %p281 = scmp.eq.s32.totalorder %s36, 0
      %p282 = por %p280, %p281
      %p283 = scmp.le.s32.totalorder 1, %s30
      %p284 = scmp.lt.s32.totalorder %s30, 5
      %p285 = pnand %p283, %p284
      %p286 = pneg %p285
      // Predicated region
      $region9: #{realnvp_forward.1} parent=5 // pred_check
        _
      $region10: #{realnvp_forward.1} parent=5 // pred_check_branch
        %288 = sbr.rel (%p285) target = $region12
      $region11: #{realnvp_forward.1} parent=5 // pred_region
        %s289 = ssub.s32 %s30, 1
        // Predicated region
        $region13: #{realnvp_forward.1} parent=11 // pred_check
          %p290 = pneg %p51
        $region14: #{realnvp_forward.1} parent=11 // pred_check_branch
          %292 = sbr.rel (%p290) target = $region16
        $region15: #{realnvp_forward.1} parent=11 // pred_region
          %294 = vsyncadd [#allocation3], 0
          %s296 = sshll.u32 %s0, 4
          %s297 = int_to_ptr.hbm [resolvable:$true] %s296
          %s298 = sshll.u32 [#allocation2], 4
          %s299 = int_to_ptr.vmem [resolvable:$true] %s298
          %301 = dma.hbm_to_vmem [thread:$0]  %s297, 256, %s299, [#allocation3]
        $region16: #{realnvp_forward.1} parent=11 // pred_fallthru
          _
      $region12: #{realnvp_forward.1} parent=5 // pred_fallthru
        _
      %p302 = scmp.lt.s32.totalorder %s30, 4
      // Predicated region
      $region17: #{realnvp_forward.1} parent=5 // pred_check
        %p303 = pneg %p302
      $region18: #{realnvp_forward.1} parent=5 // pred_check_branch
        %305 = sbr.rel (%p303) target = $region20
      $region19: #{realnvp_forward.1} parent=5 // pred_region
        // Predicated region
        $region21: #{realnvp_forward.1} parent=19 // pred_check
          %p306 = pneg %p71
        $region22: #{realnvp_forward.1} parent=19 // pred_check_branch
          %308 = sbr.rel (%p306) target = $region24
        $region23: #{realnvp_forward.1} parent=19 // pred_region
          %s309 = sand.u32 %s30, 1
          %s310 = scalar_lea.sflag [#allocation6], %s309
          %s311 = sand.u32 %s61, 1
          %s312 = smul.addr %s311, 2
          %s313 = scalar_lea.vmem [#allocation5], %s312
          %315 = vsyncadd %s310, 0
          %s316 = smul.addr %s30, 2
          %s317 = scalar_lea.hbm %s1, %s316
          %s319 = sshll.u32 %s317, 4
          %s320 = int_to_ptr.hbm [resolvable:$true] %s319
          %s321 = sshll.u32 %s313, 4
          %s322 = int_to_ptr.vmem [resolvable:$true] %s321
          %324 = dma.hbm_to_vmem [thread:$0]  %s320, 32, %s322, %s310
        $region24: #{realnvp_forward.1} parent=19 // pred_fallthru
          _
        // Predicated region
        $region25: #{realnvp_forward.1} parent=19 // pred_check
          %p325 = pneg %p97
        $region26: #{realnvp_forward.1} parent=19 // pred_check_branch
          %327 = sbr.rel (%p325) target = $region28
        $region27: #{realnvp_forward.1} parent=19 // pred_region
          %s328 = sand.u32 %s30, 1
          %s329 = scalar_lea.sflag [#allocation6], %s328
          %s330 = sand.u32 %s87, 1
          %s331 = smul.addr %s330, 1024
          %s332 = scalar_lea.vmem [#allocation7], %s331
          %334 = vsyncadd %s329, 0
          %s335 = smul.addr %s30, 256
          %s336 = smul.addr %s335, 4
          %s337 = scalar_lea.hbm %s2, %s336
          %s338 = sshll.u32 %s337, 4
          %s339 = int_to_ptr.hbm [resolvable:$true] %s338
          %s340 = sshll.u32 %s332, 4
          %s341 = int_to_ptr.vmem [resolvable:$true] %s340
          %346 = dma.hbm_to_vmem [thread:$0]  %s339, 16384, %s341, %s329, 512, 512, 32
        $region28: #{realnvp_forward.1} parent=19 // pred_fallthru
          _
        // Predicated region
        $region29: #{realnvp_forward.1} parent=19 // pred_check
          %p347 = pneg %p123
        $region30: #{realnvp_forward.1} parent=19 // pred_check_branch
          %349 = sbr.rel (%p347) target = $region32
        $region31: #{realnvp_forward.1} parent=19 // pred_region
          %s350 = sand.u32 %s30, 1
          %s351 = scalar_lea.sflag [#allocation9], %s350
          %s352 = sand.u32 %s113, 1
          %s353 = smul.addr %s352, 8
          %s354 = scalar_lea.vmem [#allocation8], %s353
          %356 = vsyncadd %s351, 0
          %s357 = smul.addr %s30, 8
          %s358 = scalar_lea.hbm %s3, %s357
          %s360 = sshll.u32 %s358, 4
          %s361 = int_to_ptr.hbm [resolvable:$true] %s360
          %s362 = sshll.u32 %s354, 4
          %s363 = int_to_ptr.vmem [resolvable:$true] %s362
          %365 = dma.hbm_to_vmem [thread:$0]  %s361, 128, %s363, %s351
        $region32: #{realnvp_forward.1} parent=19 // pred_fallthru
          _
        // Predicated region
        $region33: #{realnvp_forward.1} parent=19 // pred_check
          %p366 = pneg %p149
        $region34: #{realnvp_forward.1} parent=19 // pred_check_branch
          %368 = sbr.rel (%p366) target = $region36
        $region35: #{realnvp_forward.1} parent=19 // pred_region
          %s369 = sand.u32 %s30, 1
          %s370 = scalar_lea.sflag [#allocation9], %s369
          %s371 = sand.u32 %s139, 1
          %s372 = smul.addr %s371, 512
          %s373 = scalar_lea.vmem [#allocation10], %s372
          %375 = vsyncadd %s370, 0
          %s376 = smul.addr %s30, 128
          %s377 = smul.addr %s376, 4
          %s378 = scalar_lea.hbm %s4, %s377
          %s379 = sshll.u32 %s378, 4
          %s380 = int_to_ptr.hbm [resolvable:$true] %s379
          %s381 = sshll.u32 %s373, 4
          %s382 = int_to_ptr.vmem [resolvable:$true] %s381
          %387 = dma.hbm_to_vmem [thread:$0]  %s380, 8192, %s382, %s370, 128, 128, 8
        $region36: #{realnvp_forward.1} parent=19 // pred_fallthru
          _
        // Predicated region
        $region37: #{realnvp_forward.1} parent=19 // pred_check
          %p388 = pneg %p175
        $region38: #{realnvp_forward.1} parent=19 // pred_check_branch
          %390 = sbr.rel (%p388) target = $region40
        $region39: #{realnvp_forward.1} parent=19 // pred_region
          %s391 = sand.u32 %s30, 1
          %s392 = scalar_lea.sflag [#allocation12], %s391
          %s393 = sand.u32 %s165, 1
          %s394 = smul.addr %s393, 2
          %s395 = scalar_lea.vmem [#allocation11], %s394
          %397 = vsyncadd %s392, 0
          %s398 = smul.addr %s30, 2
          %s399 = scalar_lea.hbm %s5, %s398
          %s401 = sshll.u32 %s399, 4
          %s402 = int_to_ptr.hbm [resolvable:$true] %s401
          %s403 = sshll.u32 %s395, 4
          %s404 = int_to_ptr.vmem [resolvable:$true] %s403
          %406 = dma.hbm_to_vmem [thread:$0]  %s402, 32, %s404, %s392
        $region40: #{realnvp_forward.1} parent=19 // pred_fallthru
          _
        // Predicated region
        $region41: #{realnvp_forward.1} parent=19 // pred_check
          %p407 = pneg %p201
        $region42: #{realnvp_forward.1} parent=19 // pred_check_branch
          %409 = sbr.rel (%p407) target = $region44
        $region43: #{realnvp_forward.1} parent=19 // pred_region
          %s410 = sand.u32 %s30, 1
          %s411 = scalar_lea.sflag [#allocation12], %s410
          %s412 = sand.u32 %s191, 1
          %s413 = smul.addr %s412, 512
          %s414 = scalar_lea.vmem [#allocation13], %s413
          %416 = vsyncadd %s411, 0
          %s417 = smul.addr %s30, 128
          %s418 = smul.addr %s417, 4
          %s419 = scalar_lea.hbm %s6, %s418
          %s420 = sshll.u32 %s419, 4
          %s421 = int_to_ptr.hbm [resolvable:$true] %s420
          %s422 = sshll.u32 %s414, 4
          %s423 = int_to_ptr.vmem [resolvable:$true] %s422
          %428 = dma.hbm_to_vmem [thread:$0]  %s421, 8192, %s423, %s411, 128, 128, 8
        $region44: #{realnvp_forward.1} parent=19 // pred_fallthru
          _
        // Predicated region
        $region45: #{realnvp_forward.1} parent=19 // pred_check
          %p429 = pneg %p227
        $region46: #{realnvp_forward.1} parent=19 // pred_check_branch
          %431 = sbr.rel (%p429) target = $region48
        $region47: #{realnvp_forward.1} parent=19 // pred_region
          %s432 = sand.u32 %s217, 1
          %s433 = scalar_lea.sflag [#allocation15], %s432
          %s434 = sand.u32 %s217, 1
          %s435 = smul.addr %s434, 2
          %s436 = scalar_lea.vmem [#allocation14], %s435
          %438 = vsyncadd %s433, 0
          %s439 = smul.addr %s30, 2
          %s440 = scalar_lea.hbm %s7, %s439
          %s442 = sshll.u32 %s440, 4
          %s443 = int_to_ptr.hbm [resolvable:$true] %s442
          %s444 = sshll.u32 %s436, 4
          %s445 = int_to_ptr.vmem [resolvable:$true] %s444
          %447 = dma.hbm_to_vmem [thread:$0]  %s443, 32, %s445, %s433
        $region48: #{realnvp_forward.1} parent=19 // pred_fallthru
          _
      $region20: #{realnvp_forward.1} parent=5 // pred_fallthru
        _
      %p448 = scmp.le.s32.totalorder 1, %s30
      %p449 = scmp.lt.s32.totalorder %s30, 5
      %p450 = pnand %p448, %p449
      %p451 = pneg %p450
      // Predicated region
      $region49: #{realnvp_forward.1} parent=5 // pred_check
        _
      $region50: #{realnvp_forward.1} parent=5 // pred_check_branch
        %453 = sbr.rel (%p450) target = $region52
      $region51: #{realnvp_forward.1} parent=5 // pred_region
        %s454 = ssub.s32 %s30, 1
        // Predicated region
        $region53: #{realnvp_forward.1} parent=51 // pred_check
          %p455 = pneg %p51
        $region54: #{realnvp_forward.1} parent=51 // pred_check_branch
          %457 = sbr.rel (%p455) target = $region56
        $region55: #{realnvp_forward.1} parent=51 // pred_region
          %459 = dma.done [#allocation3], 256
        $region56: #{realnvp_forward.1} parent=51 // pred_fallthru
          _
        %s460 = sand.u32 %s35, 1
        %s461 = scalar_lea.sflag [#allocation6], %s460
        %s462 = sand.u32 %s64, 1
        %s463 = smul.addr %s462, 2
        %s464 = scalar_lea.vmem [#allocation5], %s463
        // Predicated region
        $region57: #{realnvp_forward.1} parent=51 // pred_check
          %p465 = pneg %p77
        $region58: #{realnvp_forward.1} parent=51 // pred_check_branch
          %467 = sbr.rel (%p465) target = $region60
        $region59: #{realnvp_forward.1} parent=51 // pred_region
          %469 = dma.done %s461, 32
        $region60: #{realnvp_forward.1} parent=51 // pred_fallthru
          _
        %s470 = sand.u32 %s35, 1
        %s471 = scalar_lea.sflag [#allocation6], %s470
        %s472 = sand.u32 %s90, 1
        %s473 = smul.addr %s472, 1024
        %s474 = scalar_lea.vmem [#allocation7], %s473
        // Predicated region
        $region61: #{realnvp_forward.1} parent=51 // pred_check
          %p475 = pneg %p103
        $region62: #{realnvp_forward.1} parent=51 // pred_check_branch
          %477 = sbr.rel (%p475) target = $region64
        $region63: #{realnvp_forward.1} parent=51 // pred_region
          %479 = dma.done %s471, 16384
        $region64: #{realnvp_forward.1} parent=51 // pred_fallthru
          _
        %s480 = sand.u32 %s35, 1
        %s481 = scalar_lea.sflag [#allocation9], %s480
        %s482 = sand.u32 %s116, 1
        %s483 = smul.addr %s482, 8
        %s484 = scalar_lea.vmem [#allocation8], %s483
        // Predicated region
        $region65: #{realnvp_forward.1} parent=51 // pred_check
          %p485 = pneg %p129
        $region66: #{realnvp_forward.1} parent=51 // pred_check_branch
          %487 = sbr.rel (%p485) target = $region68
        $region67: #{realnvp_forward.1} parent=51 // pred_region
          %489 = dma.done %s481, 128
        $region68: #{realnvp_forward.1} parent=51 // pred_fallthru
          _
        %s490 = sand.u32 %s35, 1
        %s491 = scalar_lea.sflag [#allocation9], %s490
        %s492 = sand.u32 %s142, 1
        %s493 = smul.addr %s492, 512
        %s494 = scalar_lea.vmem [#allocation10], %s493
        // Predicated region
        $region69: #{realnvp_forward.1} parent=51 // pred_check
          %p495 = pneg %p155
        $region70: #{realnvp_forward.1} parent=51 // pred_check_branch
          %497 = sbr.rel (%p495) target = $region72
        $region71: #{realnvp_forward.1} parent=51 // pred_region
          %499 = dma.done %s491, 8192
        $region72: #{realnvp_forward.1} parent=51 // pred_fallthru
          _
        %s500 = sand.u32 %s35, 1
        %s501 = scalar_lea.sflag [#allocation12], %s500
        %s502 = sand.u32 %s168, 1
        %s503 = smul.addr %s502, 2
        %s504 = scalar_lea.vmem [#allocation11], %s503
        // Predicated region
        $region73: #{realnvp_forward.1} parent=51 // pred_check
          %p505 = pneg %p181
        $region74: #{realnvp_forward.1} parent=51 // pred_check_branch
          %507 = sbr.rel (%p505) target = $region76
        $region75: #{realnvp_forward.1} parent=51 // pred_region
          %509 = dma.done %s501, 32
        $region76: #{realnvp_forward.1} parent=51 // pred_fallthru
          _
        %s510 = sand.u32 %s35, 1
        %s511 = scalar_lea.sflag [#allocation12], %s510
        %s512 = sand.u32 %s194, 1
        %s513 = smul.addr %s512, 512
        %s514 = scalar_lea.vmem [#allocation13], %s513
        // Predicated region
        $region77: #{realnvp_forward.1} parent=51 // pred_check
          %p515 = pneg %p207
        $region78: #{realnvp_forward.1} parent=51 // pred_check_branch
          %517 = sbr.rel (%p515) target = $region80
        $region79: #{realnvp_forward.1} parent=51 // pred_region
          %519 = dma.done %s511, 8192
        $region80: #{realnvp_forward.1} parent=51 // pred_fallthru
          _
        %s520 = sand.u32 %s220, 1
        %s521 = scalar_lea.sflag [#allocation15], %s520
        %s522 = sand.u32 %s220, 1
        %s523 = smul.addr %s522, 2
        %s524 = scalar_lea.vmem [#allocation14], %s523
        // Predicated region
        $region81: #{realnvp_forward.1} parent=51 // pred_check
          %p525 = pneg %p233
        $region82: #{realnvp_forward.1} parent=51 // pred_check_branch
          %527 = sbr.rel (%p525) target = $region84
        $region83: #{realnvp_forward.1} parent=51 // pred_region
          %529 = dma.done %s521, 32
        $region84: #{realnvp_forward.1} parent=51 // pred_fallthru
          _
        %p530 = pneg %p51
        %p531 = pneg %p48
        %s532 = sand.u32 %s35, 1
        %s533 = scalar_lea.sflag [#allocation6], %s532
        %s534 = sand.u32 %s64, 1
        %s535 = smul.addr %s534, 2
        %s536 = scalar_lea.vmem [#allocation5], %s535
        %p537 = pneg %p77
        %p538 = pneg %p74
        %s539 = sand.u32 %s35, 1
        %s540 = scalar_lea.sflag [#allocation6], %s539
        %s541 = sand.u32 %s90, 1
        %s542 = smul.addr %s541, 1024
        %s543 = scalar_lea.vmem [#allocation7], %s542
        %p544 = pneg %p103
        %p545 = pneg %p100
        %s546 = sand.u32 %s35, 1
        %s547 = scalar_lea.sflag [#allocation9], %s546
        %s548 = sand.u32 %s116, 1
        %s549 = smul.addr %s548, 8
        %s550 = scalar_lea.vmem [#allocation8], %s549
        %p551 = pneg %p129
        %p552 = pneg %p126
        %s553 = sand.u32 %s35, 1
        %s554 = scalar_lea.sflag [#allocation9], %s553
        %s555 = sand.u32 %s142, 1
        %s556 = smul.addr %s555, 512
        %s557 = scalar_lea.vmem [#allocation10], %s556
        %p558 = pneg %p155
        %p559 = pneg %p152
        %s560 = sand.u32 %s35, 1
        %s561 = scalar_lea.sflag [#allocation12], %s560
        %s562 = sand.u32 %s168, 1
        %s563 = smul.addr %s562, 2
        %s564 = scalar_lea.vmem [#allocation11], %s563
        %p565 = pneg %p181
        %p566 = pneg %p178
        %s567 = sand.u32 %s35, 1
        %s568 = scalar_lea.sflag [#allocation12], %s567
        %s569 = sand.u32 %s194, 1
        %s570 = smul.addr %s569, 512
        %s571 = scalar_lea.vmem [#allocation13], %s570
        %p572 = pneg %p207
        %p573 = pneg %p204
        %s574 = sand.u32 %s220, 1
        %s575 = scalar_lea.sflag [#allocation15], %s574
        %s576 = sand.u32 %s220, 1
        %s577 = smul.addr %s576, 2
        %s578 = scalar_lea.vmem [#allocation14], %s577
        %p579 = pneg %p233
        %p580 = pneg %p230
        %p581 = pneg %p254
        %p582 = pneg %p251
        %p583 = pneg %p275
        %p584 = pneg %p272
        %p585 = scmp.eq.s32.totalorder %s35, 0
        // Predicated region
        $region85: #{realnvp_forward.1} parent=51 // pred_check
          %p586 = pneg %p585
        $region86: #{realnvp_forward.1} parent=51 // pred_check_branch
          %588 = sbr.rel (%p586) target = $region88
        $region87: #{realnvp_forward.1} parent=51 // pred_region
          %v589 = vld [vmem:[#allocation2] sm:$0xff]
          %v590 = vld [vmem:[#allocation2 + $0x8] sm:$0xff]
          %591 = vst [vmem:[#allocation16] sm:$0xff] %v589
          %592 = vst [vmem:[#allocation16 + $0x8] sm:$0xff] %v590
          %vm593 = vcmask 7168
          %594 = vst.msk [vmem:[%s9] sm:$0xff] %vm593, 0.0
        $region88: #{realnvp_forward.1} parent=51 // pred_fallthru
          _
        %v595 = vld [vmem:[#allocation16] sm:$0xff]
        %v596 = vld [vmem:[#allocation16 + $0x8] sm:$0xff]
        %v597 = vld [vmem:[%s464] sm:$0x3]
        %v598 = vsub.f32 1.0, %v597
        %v600 = vperm.slane %v597, 0
        %v601 = vperm.slane %v597, 1
        %v604 = vmul.f32 %v595, %v600
        %v605 = vmul.f32 %v596, %v601
        %v606 = vpack.c.bf16 %v604, %v604
        %v607 = vpack.c.bf16 %v605, %v605
        %v608 = vld [vmem:[%s474] sm:$0xff]
        %v609 = vld [vmem:[%s474 + $0x8] sm:$0xff]
        %v610 = vld [vmem:[%s474 + $0x10] sm:$0xff]
        %v611 = vld [vmem:[%s474 + $0x18] sm:$0xff]
        %v612 = vld [vmem:[%s474 + $0x20] sm:$0xff]
        %v613 = vld [vmem:[%s474 + $0x28] sm:$0xff]
        %v614 = vld [vmem:[%s474 + $0x30] sm:$0xff]
        %v615 = vld [vmem:[%s474 + $0x38] sm:$0xff]
        %v616 = vld [vmem:[%s474 + $0x40] sm:$0xff]
        %v617 = vld [vmem:[%s474 + $0x48] sm:$0xff]
        %v618 = vld [vmem:[%s474 + $0x50] sm:$0xff]
        %v619 = vld [vmem:[%s474 + $0x58] sm:$0xff]
        %v620 = vld [vmem:[%s474 + $0x60] sm:$0xff]
        %v621 = vld [vmem:[%s474 + $0x68] sm:$0xff]
        %v622 = vld [vmem:[%s474 + $0x70] sm:$0xff]
        %v623 = vld [vmem:[%s474 + $0x78] sm:$0xff]
        %v624 = vld [vmem:[%s474 + $0x80] sm:$0xff]
        %v625 = vld [vmem:[%s474 + $0x88] sm:$0xff]
        %v626 = vld [vmem:[%s474 + $0x90] sm:$0xff]
        %v627 = vld [vmem:[%s474 + $0x98] sm:$0xff]
        %v628 = vld [vmem:[%s474 + $0xa0] sm:$0xff]
        %v629 = vld [vmem:[%s474 + $0xa8] sm:$0xff]
        %v630 = vld [vmem:[%s474 + $0xb0] sm:$0xff]
        %v631 = vld [vmem:[%s474 + $0xb8] sm:$0xff]
        %v632 = vld [vmem:[%s474 + $0xc0] sm:$0xff]
        %v633 = vld [vmem:[%s474 + $0xc8] sm:$0xff]
        %v634 = vld [vmem:[%s474 + $0xd0] sm:$0xff]
        %v635 = vld [vmem:[%s474 + $0xd8] sm:$0xff]
        %v636 = vld [vmem:[%s474 + $0xe0] sm:$0xff]
        %v637 = vld [vmem:[%s474 + $0xe8] sm:$0xff]
        %v638 = vld [vmem:[%s474 + $0xf0] sm:$0xff]
        %v639 = vld [vmem:[%s474 + $0xf8] sm:$0xff]
        %v640 = vld [vmem:[%s474 + $0x100] sm:$0xff]
        %v641 = vld [vmem:[%s474 + $0x108] sm:$0xff]
        %v642 = vld [vmem:[%s474 + $0x110] sm:$0xff]
        %v643 = vld [vmem:[%s474 + $0x118] sm:$0xff]
        %v644 = vld [vmem:[%s474 + $0x120] sm:$0xff]
        %v645 = vld [vmem:[%s474 + $0x128] sm:$0xff]
        %v646 = vld [vmem:[%s474 + $0x130] sm:$0xff]
        %v647 = vld [vmem:[%s474 + $0x138] sm:$0xff]
        %v648 = vld [vmem:[%s474 + $0x140] sm:$0xff]
        %v649 = vld [vmem:[%s474 + $0x148] sm:$0xff]
        %v650 = vld [vmem:[%s474 + $0x150] sm:$0xff]
        %v651 = vld [vmem:[%s474 + $0x158] sm:$0xff]
        %v652 = vld [vmem:[%s474 + $0x160] sm:$0xff]
        %v653 = vld [vmem:[%s474 + $0x168] sm:$0xff]
        %v654 = vld [vmem:[%s474 + $0x170] sm:$0xff]
        %v655 = vld [vmem:[%s474 + $0x178] sm:$0xff]
        %v656 = vld [vmem:[%s474 + $0x180] sm:$0xff]
        %v657 = vld [vmem:[%s474 + $0x188] sm:$0xff]
        %v658 = vld [vmem:[%s474 + $0x190] sm:$0xff]
        %v659 = vld [vmem:[%s474 + $0x198] sm:$0xff]
        %v660 = vld [vmem:[%s474 + $0x1a0] sm:$0xff]
        %v661 = vld [vmem:[%s474 + $0x1a8] sm:$0xff]
        %v662 = vld [vmem:[%s474 + $0x1b0] sm:$0xff]
        %v663 = vld [vmem:[%s474 + $0x1b8] sm:$0xff]
        %v664 = vld [vmem:[%s474 + $0x1c0] sm:$0xff]
        %v665 = vld [vmem:[%s474 + $0x1c8] sm:$0xff]
        %v666 = vld [vmem:[%s474 + $0x1d0] sm:$0xff]
        %v667 = vld [vmem:[%s474 + $0x1d8] sm:$0xff]
        %v668 = vld [vmem:[%s474 + $0x1e0] sm:$0xff]
        %v669 = vld [vmem:[%s474 + $0x1e8] sm:$0xff]
        %v670 = vld [vmem:[%s474 + $0x1f0] sm:$0xff]
        %v671 = vld [vmem:[%s474 + $0x1f8] sm:$0xff]
        %v672 = vld [vmem:[%s474 + $0x200] sm:$0xff]
        %v673 = vld [vmem:[%s474 + $0x208] sm:$0xff]
        %v674 = vld [vmem:[%s474 + $0x210] sm:$0xff]
        %v675 = vld [vmem:[%s474 + $0x218] sm:$0xff]
        %v676 = vld [vmem:[%s474 + $0x220] sm:$0xff]
        %v677 = vld [vmem:[%s474 + $0x228] sm:$0xff]
        %v678 = vld [vmem:[%s474 + $0x230] sm:$0xff]
        %v679 = vld [vmem:[%s474 + $0x238] sm:$0xff]
        %v680 = vld [vmem:[%s474 + $0x240] sm:$0xff]
        %v681 = vld [vmem:[%s474 + $0x248] sm:$0xff]
        %v682 = vld [vmem:[%s474 + $0x250] sm:$0xff]
        %v683 = vld [vmem:[%s474 + $0x258] sm:$0xff]
        %v684 = vld [vmem:[%s474 + $0x260] sm:$0xff]
        %v685 = vld [vmem:[%s474 + $0x268] sm:$0xff]
        %v686 = vld [vmem:[%s474 + $0x270] sm:$0xff]
        %v687 = vld [vmem:[%s474 + $0x278] sm:$0xff]
        %v688 = vld [vmem:[%s474 + $0x280] sm:$0xff]
        %v689 = vld [vmem:[%s474 + $0x288] sm:$0xff]
        %v690 = vld [vmem:[%s474 + $0x290] sm:$0xff]
        %v691 = vld [vmem:[%s474 + $0x298] sm:$0xff]
        %v692 = vld [vmem:[%s474 + $0x2a0] sm:$0xff]
        %v693 = vld [vmem:[%s474 + $0x2a8] sm:$0xff]
        %v694 = vld [vmem:[%s474 + $0x2b0] sm:$0xff]
        %v695 = vld [vmem:[%s474 + $0x2b8] sm:$0xff]
        %v696 = vld [vmem:[%s474 + $0x2c0] sm:$0xff]
        %v697 = vld [vmem:[%s474 + $0x2c8] sm:$0xff]
        %v698 = vld [vmem:[%s474 + $0x2d0] sm:$0xff]
        %v699 = vld [vmem:[%s474 + $0x2d8] sm:$0xff]
        %v700 = vld [vmem:[%s474 + $0x2e0] sm:$0xff]
        %v701 = vld [vmem:[%s474 + $0x2e8] sm:$0xff]
        %v702 = vld [vmem:[%s474 + $0x2f0] sm:$0xff]
        %v703 = vld [vmem:[%s474 + $0x2f8] sm:$0xff]
        %v704 = vld [vmem:[%s474 + $0x300] sm:$0xff]
        %v705 = vld [vmem:[%s474 + $0x308] sm:$0xff]
        %v706 = vld [vmem:[%s474 + $0x310] sm:$0xff]
        %v707 = vld [vmem:[%s474 + $0x318] sm:$0xff]
        %v708 = vld [vmem:[%s474 + $0x320] sm:$0xff]
        %v709 = vld [vmem:[%s474 + $0x328] sm:$0xff]
        %v710 = vld [vmem:[%s474 + $0x330] sm:$0xff]
        %v711 = vld [vmem:[%s474 + $0x338] sm:$0xff]
        %v712 = vld [vmem:[%s474 + $0x340] sm:$0xff]
        %v713 = vld [vmem:[%s474 + $0x348] sm:$0xff]
        %v714 = vld [vmem:[%s474 + $0x350] sm:$0xff]
        %v715 = vld [vmem:[%s474 + $0x358] sm:$0xff]
        %v716 = vld [vmem:[%s474 + $0x360] sm:$0xff]
        %v717 = vld [vmem:[%s474 + $0x368] sm:$0xff]
        %v718 = vld [vmem:[%s474 + $0x370] sm:$0xff]
        %v719 = vld [vmem:[%s474 + $0x378] sm:$0xff]
        %v720 = vld [vmem:[%s474 + $0x380] sm:$0xff]
        %v721 = vld [vmem:[%s474 + $0x388] sm:$0xff]
        %v722 = vld [vmem:[%s474 + $0x390] sm:$0xff]
        %v723 = vld [vmem:[%s474 + $0x398] sm:$0xff]
        %v724 = vld [vmem:[%s474 + $0x3a0] sm:$0xff]
        %v725 = vld [vmem:[%s474 + $0x3a8] sm:$0xff]
        %v726 = vld [vmem:[%s474 + $0x3b0] sm:$0xff]
        %v727 = vld [vmem:[%s474 + $0x3b8] sm:$0xff]
        %v728 = vld [vmem:[%s474 + $0x3c0] sm:$0xff]
        %v729 = vld [vmem:[%s474 + $0x3c8] sm:$0xff]
        %v730 = vld [vmem:[%s474 + $0x3d0] sm:$0xff]
        %v731 = vld [vmem:[%s474 + $0x3d8] sm:$0xff]
        %v732 = vld [vmem:[%s474 + $0x3e0] sm:$0xff]
        %v733 = vld [vmem:[%s474 + $0x3e8] sm:$0xff]
        %v734 = vld [vmem:[%s474 + $0x3f0] sm:$0xff]
        %v735 = vld [vmem:[%s474 + $0x3f8] sm:$0xff]
        %v736 = vld [vmem:[%s484] sm:$0xff]
        %v738 = vperm.slane %v736, 0
        %v739 = vperm.slane %v736, 1
        %v740 = vperm.slane %v736, 2
        %v741 = vperm.slane %v736, 3
        %v742 = vperm.slane %v736, 4
        %v743 = vperm.slane %v736, 5
        %v744 = vperm.slane %v736, 6
        %v745 = vperm.slane %v736, 7
        %v882 = vunpack.c.l.b16 %v608
        %v883 = vunpack.c.h.b16 %v608
        %v884 = vunpack.c.l.b16 %v609
        %v885 = vunpack.c.h.b16 %v609
        %v886 = vunpack.c.l.b16 %v610
        %v887 = vunpack.c.h.b16 %v610
        %v888 = vunpack.c.l.b16 %v611
        %v889 = vunpack.c.h.b16 %v611
        %v890 = vunpack.c.l.b16 %v612
        %v891 = vunpack.c.h.b16 %v612
        %v892 = vunpack.c.l.b16 %v613
        %v893 = vunpack.c.h.b16 %v613
        %v894 = vunpack.c.l.b16 %v614
        %v895 = vunpack.c.h.b16 %v614
        %v896 = vunpack.c.l.b16 %v615
        %v897 = vunpack.c.h.b16 %v615
        %v898 = vunpack.c.l.b16 %v616
        %v899 = vunpack.c.h.b16 %v616
        %v900 = vunpack.c.l.b16 %v617
        %v901 = vunpack.c.h.b16 %v617
        %v902 = vunpack.c.l.b16 %v618
        %v903 = vunpack.c.h.b16 %v618
        %v904 = vunpack.c.l.b16 %v619
        %v905 = vunpack.c.h.b16 %v619
        %v906 = vunpack.c.l.b16 %v620
        %v907 = vunpack.c.h.b16 %v620
        %v908 = vunpack.c.l.b16 %v621
        %v909 = vunpack.c.h.b16 %v621
        %v910 = vunpack.c.l.b16 %v622
        %v911 = vunpack.c.h.b16 %v622
        %v912 = vunpack.c.l.b16 %v623
        %v913 = vunpack.c.h.b16 %v623
        %v914 = vunpack.c.l.b16 %v624
        %v915 = vunpack.c.h.b16 %v624
        %v916 = vunpack.c.l.b16 %v625
        %v917 = vunpack.c.h.b16 %v625
        %v918 = vunpack.c.l.b16 %v626
        %v919 = vunpack.c.h.b16 %v626
        %v920 = vunpack.c.l.b16 %v627
        %v921 = vunpack.c.h.b16 %v627
        %v922 = vunpack.c.l.b16 %v628
        %v923 = vunpack.c.h.b16 %v628
        %v924 = vunpack.c.l.b16 %v629
        %v925 = vunpack.c.h.b16 %v629
        %v926 = vunpack.c.l.b16 %v630
        %v927 = vunpack.c.h.b16 %v630
        %v928 = vunpack.c.l.b16 %v631
        %v929 = vunpack.c.h.b16 %v631
        %v930 = vunpack.c.l.b16 %v632
        %v931 = vunpack.c.h.b16 %v632
        %v932 = vunpack.c.l.b16 %v633
        %v933 = vunpack.c.h.b16 %v633
        %v934 = vunpack.c.l.b16 %v634
        %v935 = vunpack.c.h.b16 %v634
        %v936 = vunpack.c.l.b16 %v635
        %v937 = vunpack.c.h.b16 %v635
        %v938 = vunpack.c.l.b16 %v636
        %v939 = vunpack.c.h.b16 %v636
        %v940 = vunpack.c.l.b16 %v637
        %v941 = vunpack.c.h.b16 %v637
        %v942 = vunpack.c.l.b16 %v638
        %v943 = vunpack.c.h.b16 %v638
        %v944 = vunpack.c.l.b16 %v639
        %v945 = vunpack.c.h.b16 %v639
        %v946 = vunpack.c.l.b16 %v640
        %v947 = vunpack.c.h.b16 %v640
        %v948 = vunpack.c.l.b16 %v641
        %v949 = vunpack.c.h.b16 %v641
        %v950 = vunpack.c.l.b16 %v642
        %v951 = vunpack.c.h.b16 %v642
        %v952 = vunpack.c.l.b16 %v643
        %v953 = vunpack.c.h.b16 %v643
        %v954 = vunpack.c.l.b16 %v644
        %v955 = vunpack.c.h.b16 %v644
        %v956 = vunpack.c.l.b16 %v645
        %v957 = vunpack.c.h.b16 %v645
        %v958 = vunpack.c.l.b16 %v646
        %v959 = vunpack.c.h.b16 %v646
        %v960 = vunpack.c.l.b16 %v647
        %v961 = vunpack.c.h.b16 %v647
        %v962 = vunpack.c.l.b16 %v648
        %v963 = vunpack.c.h.b16 %v648
        %v964 = vunpack.c.l.b16 %v649
        %v965 = vunpack.c.h.b16 %v649
        %v966 = vunpack.c.l.b16 %v650
        %v967 = vunpack.c.h.b16 %v650
        %v968 = vunpack.c.l.b16 %v651
        %v969 = vunpack.c.h.b16 %v651
        %v970 = vunpack.c.l.b16 %v652
        %v971 = vunpack.c.h.b16 %v652
        %v972 = vunpack.c.l.b16 %v653
        %v973 = vunpack.c.h.b16 %v653
        %v974 = vunpack.c.l.b16 %v654
        %v975 = vunpack.c.h.b16 %v654
        %v976 = vunpack.c.l.b16 %v655
        %v977 = vunpack.c.h.b16 %v655
        %v978 = vunpack.c.l.b16 %v656
        %v979 = vunpack.c.h.b16 %v656
        %v980 = vunpack.c.l.b16 %v657
        %v981 = vunpack.c.h.b16 %v657
        %v982 = vunpack.c.l.b16 %v658
        %v983 = vunpack.c.h.b16 %v658
        %v984 = vunpack.c.l.b16 %v659
        %v985 = vunpack.c.h.b16 %v659
        %v986 = vunpack.c.l.b16 %v660
        %v987 = vunpack.c.h.b16 %v660
        %v988 = vunpack.c.l.b16 %v661
        %v989 = vunpack.c.h.b16 %v661
        %v990 = vunpack.c.l.b16 %v662
        %v991 = vunpack.c.h.b16 %v662
        %v992 = vunpack.c.l.b16 %v663
        %v993 = vunpack.c.h.b16 %v663
        %v994 = vunpack.c.l.b16 %v664
        %v995 = vunpack.c.h.b16 %v664
        %v996 = vunpack.c.l.b16 %v665
        %v997 = vunpack.c.h.b16 %v665
        %v998 = vunpack.c.l.b16 %v666
        %v999 = vunpack.c.h.b16 %v666
        %v1000 = vunpack.c.l.b16 %v667
        %v1001 = vunpack.c.h.b16 %v667
        %v1002 = vunpack.c.l.b16 %v668
        %v1003 = vunpack.c.h.b16 %v668
        %v1004 = vunpack.c.l.b16 %v669
        %v1005 = vunpack.c.h.b16 %v669
        %v1006 = vunpack.c.l.b16 %v670
        %v1007 = vunpack.c.h.b16 %v670
        %v1008 = vunpack.c.l.b16 %v671
        %v1009 = vunpack.c.h.b16 %v671
        %v1010 = vunpack.c.l.b16 %v672
        %v1011 = vunpack.c.h.b16 %v672
        %v1012 = vunpack.c.l.b16 %v673
        %v1013 = vunpack.c.h.b16 %v673
        %v1014 = vunpack.c.l.b16 %v674
        %v1015 = vunpack.c.h.b16 %v674
        %v1016 = vunpack.c.l.b16 %v675
        %v1017 = vunpack.c.h.b16 %v675
        %v1018 = vunpack.c.l.b16 %v676
        %v1019 = vunpack.c.h.b16 %v676
        %v1020 = vunpack.c.l.b16 %v677
        %v1021 = vunpack.c.h.b16 %v677
        %v1022 = vunpack.c.l.b16 %v678
        %v1023 = vunpack.c.h.b16 %v678
        %v1024 = vunpack.c.l.b16 %v679
        %v1025 = vunpack.c.h.b16 %v679
        %v1026 = vunpack.c.l.b16 %v680
        %v1027 = vunpack.c.h.b16 %v680
        %v1028 = vunpack.c.l.b16 %v681
        %v1029 = vunpack.c.h.b16 %v681
        %v1030 = vunpack.c.l.b16 %v682
        %v1031 = vunpack.c.h.b16 %v682
        %v1032 = vunpack.c.l.b16 %v683
        %v1033 = vunpack.c.h.b16 %v683
        %v1034 = vunpack.c.l.b16 %v684
        %v1035 = vunpack.c.h.b16 %v684
        %v1036 = vunpack.c.l.b16 %v685
        %v1037 = vunpack.c.h.b16 %v685
        %v1038 = vunpack.c.l.b16 %v686
        %v1039 = vunpack.c.h.b16 %v686
        %v1040 = vunpack.c.l.b16 %v687
        %v1041 = vunpack.c.h.b16 %v687
        %v1042 = vunpack.c.l.b16 %v688
        %v1043 = vunpack.c.h.b16 %v688
        %v1044 = vunpack.c.l.b16 %v689
        %v1045 = vunpack.c.h.b16 %v689
        %v1046 = vunpack.c.l.b16 %v690
        %v1047 = vunpack.c.h.b16 %v690
        %v1048 = vunpack.c.l.b16 %v691
        %v1049 = vunpack.c.h.b16 %v691
        %v1050 = vunpack.c.l.b16 %v692
        %v1051 = vunpack.c.h.b16 %v692
        %v1052 = vunpack.c.l.b16 %v693
        %v1053 = vunpack.c.h.b16 %v693
        %v1054 = vunpack.c.l.b16 %v694
        %v1055 = vunpack.c.h.b16 %v694
        %v1056 = vunpack.c.l.b16 %v695
        %v1057 = vunpack.c.h.b16 %v695
        %v1058 = vunpack.c.l.b16 %v696
        %v1059 = vunpack.c.h.b16 %v696
        %v1060 = vunpack.c.l.b16 %v697
        %v1061 = vunpack.c.h.b16 %v697
        %v1062 = vunpack.c.l.b16 %v698
        %v1063 = vunpack.c.h.b16 %v698
        %v1064 = vunpack.c.l.b16 %v699
        %v1065 = vunpack.c.h.b16 %v699
        %v1066 = vunpack.c.l.b16 %v700
        %v1067 = vunpack.c.h.b16 %v700
        %v1068 = vunpack.c.l.b16 %v701
        %v1069 = vunpack.c.h.b16 %v701
        %v1070 = vunpack.c.l.b16 %v702
        %v1071 = vunpack.c.h.b16 %v702
        %v1072 = vunpack.c.l.b16 %v703
        %v1073 = vunpack.c.h.b16 %v703
        %v1074 = vunpack.c.l.b16 %v704
        %v1075 = vunpack.c.h.b16 %v704
        %v1076 = vunpack.c.l.b16 %v705
        %v1077 = vunpack.c.h.b16 %v705
        %v1078 = vunpack.c.l.b16 %v706
        %v1079 = vunpack.c.h.b16 %v706
        %v1080 = vunpack.c.l.b16 %v707
        %v1081 = vunpack.c.h.b16 %v707
        %v1082 = vunpack.c.l.b16 %v708
        %v1083 = vunpack.c.h.b16 %v708
        %v1084 = vunpack.c.l.b16 %v709
        %v1085 = vunpack.c.h.b16 %v709
        %v1086 = vunpack.c.l.b16 %v710
        %v1087 = vunpack.c.h.b16 %v710
        %v1088 = vunpack.c.l.b16 %v711
        %v1089 = vunpack.c.h.b16 %v711
        %v1090 = vunpack.c.l.b16 %v712
        %v1091 = vunpack.c.h.b16 %v712
        %v1092 = vunpack.c.l.b16 %v713
        %v1093 = vunpack.c.h.b16 %v713
        %v1094 = vunpack.c.l.b16 %v714
        %v1095 = vunpack.c.h.b16 %v714
        %v1096 = vunpack.c.l.b16 %v715
        %v1097 = vunpack.c.h.b16 %v715
        %v1098 = vunpack.c.l.b16 %v716
        %v1099 = vunpack.c.h.b16 %v716
        %v1100 = vunpack.c.l.b16 %v717
        %v1101 = vunpack.c.h.b16 %v717
        %v1102 = vunpack.c.l.b16 %v718
        %v1103 = vunpack.c.h.b16 %v718
        %v1104 = vunpack.c.l.b16 %v719
        %v1105 = vunpack.c.h.b16 %v719
        %v1106 = vunpack.c.l.b16 %v720
        %v1107 = vunpack.c.h.b16 %v720
        %v1108 = vunpack.c.l.b16 %v721
        %v1109 = vunpack.c.h.b16 %v721
        %v1110 = vunpack.c.l.b16 %v722
        %v1111 = vunpack.c.h.b16 %v722
        %v1112 = vunpack.c.l.b16 %v723
        %v1113 = vunpack.c.h.b16 %v723
        %v1114 = vunpack.c.l.b16 %v724
        %v1115 = vunpack.c.h.b16 %v724
        %v1116 = vunpack.c.l.b16 %v725
        %v1117 = vunpack.c.h.b16 %v725
        %v1118 = vunpack.c.l.b16 %v726
        %v1119 = vunpack.c.h.b16 %v726
        %v1120 = vunpack.c.l.b16 %v727
        %v1121 = vunpack.c.h.b16 %v727
        %v1122 = vunpack.c.l.b16 %v728
        %v1123 = vunpack.c.h.b16 %v728
        %v1124 = vunpack.c.l.b16 %v729
        %v1125 = vunpack.c.h.b16 %v729
        %v1126 = vunpack.c.l.b16 %v730
        %v1127 = vunpack.c.h.b16 %v730
        %v1128 = vunpack.c.l.b16 %v731
        %v1129 = vunpack.c.h.b16 %v731
        %v1130 = vunpack.c.l.b16 %v732
        %v1131 = vunpack.c.h.b16 %v732
        %v1132 = vunpack.c.l.b16 %v733
        %v1133 = vunpack.c.h.b16 %v733
        %v1134 = vunpack.c.l.b16 %v734
        %v1135 = vunpack.c.h.b16 %v734
        %v1136 = vunpack.c.l.b16 %v735
        %v1137 = vunpack.c.h.b16 %v735
        %v1138 = vpack.c.b16 %v890, %v882
        %v1139 = vpack.c.b16 %v891, %v883
        %v1140 = vpack.c.b16 %v892, %v884
        %v1141 = vpack.c.b16 %v893, %v885
        %v1142 = vpack.c.b16 %v894, %v886
        %v1143 = vpack.c.b16 %v895, %v887
        %v1144 = vpack.c.b16 %v896, %v888
        %v1145 = vpack.c.b16 %v897, %v889
        %v1146 = vpack.c.b16 %v906, %v898
        %v1147 = vpack.c.b16 %v907, %v899
        %v1148 = vpack.c.b16 %v908, %v900
        %v1149 = vpack.c.b16 %v909, %v901
        %v1150 = vpack.c.b16 %v910, %v902
        %v1151 = vpack.c.b16 %v911, %v903
        %v1152 = vpack.c.b16 %v912, %v904
        %v1153 = vpack.c.b16 %v913, %v905
        %v1154 = vpack.c.b16 %v922, %v914
        %v1155 = vpack.c.b16 %v923, %v915
        %v1156 = vpack.c.b16 %v924, %v916
        %v1157 = vpack.c.b16 %v925, %v917
        %v1158 = vpack.c.b16 %v926, %v918
        %v1159 = vpack.c.b16 %v927, %v919
        %v1160 = vpack.c.b16 %v928, %v920
        %v1161 = vpack.c.b16 %v929, %v921
        %v1162 = vpack.c.b16 %v938, %v930
        %v1163 = vpack.c.b16 %v939, %v931
        %v1164 = vpack.c.b16 %v940, %v932
        %v1165 = vpack.c.b16 %v941, %v933
        %v1166 = vpack.c.b16 %v942, %v934
        %v1167 = vpack.c.b16 %v943, %v935
        %v1168 = vpack.c.b16 %v944, %v936
        %v1169 = vpack.c.b16 %v945, %v937
        %v1170 = vpack.c.b16 %v954, %v946
        %v1171 = vpack.c.b16 %v955, %v947
        %v1172 = vpack.c.b16 %v956, %v948
        %v1173 = vpack.c.b16 %v957, %v949
        %v1174 = vpack.c.b16 %v958, %v950
        %v1175 = vpack.c.b16 %v959, %v951
        %v1176 = vpack.c.b16 %v960, %v952
        %v1177 = vpack.c.b16 %v961, %v953
        %v1178 = vpack.c.b16 %v970, %v962
        %v1179 = vpack.c.b16 %v971, %v963
        %v1180 = vpack.c.b16 %v972, %v964
        %v1181 = vpack.c.b16 %v973, %v965
        %v1182 = vpack.c.b16 %v974, %v966
        %v1183 = vpack.c.b16 %v975, %v967
        %v1184 = vpack.c.b16 %v976, %v968
        %v1185 = vpack.c.b16 %v977, %v969
        %v1186 = vpack.c.b16 %v986, %v978
        %v1187 = vpack.c.b16 %v987, %v979
        %v1188 = vpack.c.b16 %v988, %v980
        %v1189 = vpack.c.b16 %v989, %v981
        %v1190 = vpack.c.b16 %v990, %v982
        %v1191 = vpack.c.b16 %v991, %v983
        %v1192 = vpack.c.b16 %v992, %v984
        %v1193 = vpack.c.b16 %v993, %v985
        %v1194 = vpack.c.b16 %v1002, %v994
        %v1195 = vpack.c.b16 %v1003, %v995
        %v1196 = vpack.c.b16 %v1004, %v996
        %v1197 = vpack.c.b16 %v1005, %v997
        %v1198 = vpack.c.b16 %v1006, %v998
        %v1199 = vpack.c.b16 %v1007, %v999
        %v1200 = vpack.c.b16 %v1008, %v1000
        %v1201 = vpack.c.b16 %v1009, %v1001
        %v1202 = vpack.c.b16 %v1018, %v1010
        %v1203 = vpack.c.b16 %v1019, %v1011
        %v1204 = vpack.c.b16 %v1020, %v1012
        %v1205 = vpack.c.b16 %v1021, %v1013
        %v1206 = vpack.c.b16 %v1022, %v1014
        %v1207 = vpack.c.b16 %v1023, %v1015
        %v1208 = vpack.c.b16 %v1024, %v1016
        %v1209 = vpack.c.b16 %v1025, %v1017
        %v1210 = vpack.c.b16 %v1034, %v1026
        %v1211 = vpack.c.b16 %v1035, %v1027
        %v1212 = vpack.c.b16 %v1036, %v1028
        %v1213 = vpack.c.b16 %v1037, %v1029
        %v1214 = vpack.c.b16 %v1038, %v1030
        %v1215 = vpack.c.b16 %v1039, %v1031
        %v1216 = vpack.c.b16 %v1040, %v1032
        %v1217 = vpack.c.b16 %v1041, %v1033
        %v1218 = vpack.c.b16 %v1050, %v1042
        %v1219 = vpack.c.b16 %v1051, %v1043
        %v1220 = vpack.c.b16 %v1052, %v1044
        %v1221 = vpack.c.b16 %v1053, %v1045
        %v1222 = vpack.c.b16 %v1054, %v1046
        %v1223 = vpack.c.b16 %v1055, %v1047
        %v1224 = vpack.c.b16 %v1056, %v1048
        %v1225 = vpack.c.b16 %v1057, %v1049
        %v1226 = vpack.c.b16 %v1066, %v1058
        %v1227 = vpack.c.b16 %v1067, %v1059
        %v1228 = vpack.c.b16 %v1068, %v1060
        %v1229 = vpack.c.b16 %v1069, %v1061
        %v1230 = vpack.c.b16 %v1070, %v1062
        %v1231 = vpack.c.b16 %v1071, %v1063
        %v1232 = vpack.c.b16 %v1072, %v1064
        %v1233 = vpack.c.b16 %v1073, %v1065
        %v1234 = vpack.c.b16 %v1082, %v1074
        %v1235 = vpack.c.b16 %v1083, %v1075
        %v1236 = vpack.c.b16 %v1084, %v1076
        %v1237 = vpack.c.b16 %v1085, %v1077
        %v1238 = vpack.c.b16 %v1086, %v1078
        %v1239 = vpack.c.b16 %v1087, %v1079
        %v1240 = vpack.c.b16 %v1088, %v1080
        %v1241 = vpack.c.b16 %v1089, %v1081
        %v1242 = vpack.c.b16 %v1098, %v1090
        %v1243 = vpack.c.b16 %v1099, %v1091
        %v1244 = vpack.c.b16 %v1100, %v1092
        %v1245 = vpack.c.b16 %v1101, %v1093
        %v1246 = vpack.c.b16 %v1102, %v1094
        %v1247 = vpack.c.b16 %v1103, %v1095
        %v1248 = vpack.c.b16 %v1104, %v1096
        %v1249 = vpack.c.b16 %v1105, %v1097
        %v1250 = vpack.c.b16 %v1114, %v1106
        %v1251 = vpack.c.b16 %v1115, %v1107
        %v1252 = vpack.c.b16 %v1116, %v1108
        %v1253 = vpack.c.b16 %v1117, %v1109
        %v1254 = vpack.c.b16 %v1118, %v1110
        %v1255 = vpack.c.b16 %v1119, %v1111
        %v1256 = vpack.c.b16 %v1120, %v1112
        %v1257 = vpack.c.b16 %v1121, %v1113
        %v1258 = vpack.c.b16 %v1130, %v1122
        %v1259 = vpack.c.b16 %v1131, %v1123
        %v1260 = vpack.c.b16 %v1132, %v1124
        %v1261 = vpack.c.b16 %v1133, %v1125
        %v1262 = vpack.c.b16 %v1134, %v1126
        %v1263 = vpack.c.b16 %v1135, %v1127
        %v1264 = vpack.c.b16 %v1136, %v1128
        %v1265 = vpack.c.b16 %v1137, %v1129
        %1394 = vmatpush.bf16.msra.mxu0 %v1194
        %1395 = vmatpush.bf16.msra.mxu0 %v1186
        %1396 = vmatpush.bf16.msra.mxu0 %v1178
        %1397 = vmatpush.bf16.msra.mxu0 %v1170
        %1398 = vmatpush.bf16.msra.mxu0 %v1162
        %1399 = vmatpush.bf16.msra.mxu0 %v1154
        %1400 = vmatpush.bf16.msra.mxu0 %v1146
        %1401 = vmatpush.bf16.msra.mxu0 %v1138
        %1402 = vmatmul.bf16.gmra.mxu0 %v606
        %v1403 = vpop.f32.mrf.mxu0
        %v1404 = vadd.f32 %v738, %v1403
        %v1405 = vpop.f32.mrf.mxu0
        %1406 = vdwg.mxu0
        %1407 = vmatpush.bf16.msra.mxu0 %v1258
        %1408 = vmatpush.bf16.msra.mxu0 %v1250
        %1409 = vmatpush.bf16.msra.mxu0 %v1242
        %1410 = vmatpush.bf16.msra.mxu0 %v1234
        %1411 = vmatpush.bf16.msra.mxu0 %v1226
        %1412 = vmatpush.bf16.msra.mxu0 %v1218
        %1413 = vmatpush.bf16.msra.mxu0 %v1210
        %1414 = vmatpush.bf16.msra.mxu0 %v1202
        %1415 = vmatmul.bf16.gmra.mxu0 %v607
        %v1416 = vpop.f32.mrf.mxu0
        %v1417 = vadd.f32 %v1404, %v1416
        %v1418 = vpop.f32.mrf.mxu0
        %1419 = vdwg.mxu0
        %1420 = vmatpush.bf16.msra.mxu0 %v1195
        %1421 = vmatpush.bf16.msra.mxu0 %v1187
        %1422 = vmatpush.bf16.msra.mxu0 %v1179
        %1423 = vmatpush.bf16.msra.mxu0 %v1171
        %1424 = vmatpush.bf16.msra.mxu0 %v1163
        %1425 = vmatpush.bf16.msra.mxu0 %v1155
        %1426 = vmatpush.bf16.msra.mxu0 %v1147
        %1427 = vmatpush.bf16.msra.mxu0 %v1139
        %1428 = vmatmul.bf16.gmra.mxu0 %v606
        %v1429 = vpop.f32.mrf.mxu0
        %v1430 = vadd.f32 %v739, %v1429
        %v1431 = vpop.f32.mrf.mxu0
        %1432 = vdwg.mxu0
        %1433 = vmatpush.bf16.msra.mxu0 %v1259
        %1434 = vmatpush.bf16.msra.mxu0 %v1251
        %1435 = vmatpush.bf16.msra.mxu0 %v1243
        %1436 = vmatpush.bf16.msra.mxu0 %v1235
        %1437 = vmatpush.bf16.msra.mxu0 %v1227
        %1438 = vmatpush.bf16.msra.mxu0 %v1219
        %1439 = vmatpush.bf16.msra.mxu0 %v1211
        %1440 = vmatpush.bf16.msra.mxu0 %v1203
        %1441 = vmatmul.bf16.gmra.mxu0 %v607
        %v1442 = vpop.f32.mrf.mxu0
        %v1443 = vadd.f32 %v1430, %v1442
        %v1444 = vpop.f32.mrf.mxu0
        %1445 = vdwg.mxu0
        %1446 = vmatpush.bf16.msra.mxu0 %v1196
        %1447 = vmatpush.bf16.msra.mxu0 %v1188
        %1448 = vmatpush.bf16.msra.mxu0 %v1180
        %1449 = vmatpush.bf16.msra.mxu0 %v1172
        %1450 = vmatpush.bf16.msra.mxu0 %v1164
        %1451 = vmatpush.bf16.msra.mxu0 %v1156
        %1452 = vmatpush.bf16.msra.mxu0 %v1148
        %1453 = vmatpush.bf16.msra.mxu0 %v1140
        %1454 = vmatmul.bf16.gmra.mxu0 %v606
        %v1455 = vpop.f32.mrf.mxu0
        %v1456 = vadd.f32 %v740, %v1455
        %v1457 = vpop.f32.mrf.mxu0
        %1458 = vdwg.mxu0
        %1459 = vmatpush.bf16.msra.mxu0 %v1260
        %1460 = vmatpush.bf16.msra.mxu0 %v1252
        %1461 = vmatpush.bf16.msra.mxu0 %v1244
        %1462 = vmatpush.bf16.msra.mxu0 %v1236
        %1463 = vmatpush.bf16.msra.mxu0 %v1228
        %1464 = vmatpush.bf16.msra.mxu0 %v1220
        %1465 = vmatpush.bf16.msra.mxu0 %v1212
        %1466 = vmatpush.bf16.msra.mxu0 %v1204
        %1467 = vmatmul.bf16.gmra.mxu0 %v607
        %v1468 = vpop.f32.mrf.mxu0
        %v1469 = vadd.f32 %v1456, %v1468
        %v1470 = vpop.f32.mrf.mxu0
        %1471 = vdwg.mxu0
        %1472 = vmatpush.bf16.msra.mxu0 %v1197
        %1473 = vmatpush.bf16.msra.mxu0 %v1189
        %1474 = vmatpush.bf16.msra.mxu0 %v1181
        %1475 = vmatpush.bf16.msra.mxu0 %v1173
        %1476 = vmatpush.bf16.msra.mxu0 %v1165
        %1477 = vmatpush.bf16.msra.mxu0 %v1157
        %1478 = vmatpush.bf16.msra.mxu0 %v1149
        %1479 = vmatpush.bf16.msra.mxu0 %v1141
        %1480 = vmatmul.bf16.gmra.mxu0 %v606
        %v1481 = vpop.f32.mrf.mxu0
        %v1482 = vadd.f32 %v741, %v1481
        %v1483 = vpop.f32.mrf.mxu0
        %1484 = vdwg.mxu0
        %1485 = vmatpush.bf16.msra.mxu0 %v1261
        %1486 = vmatpush.bf16.msra.mxu0 %v1253
        %1487 = vmatpush.bf16.msra.mxu0 %v1245
        %1488 = vmatpush.bf16.msra.mxu0 %v1237
        %1489 = vmatpush.bf16.msra.mxu0 %v1229
        %1490 = vmatpush.bf16.msra.mxu0 %v1221
        %1491 = vmatpush.bf16.msra.mxu0 %v1213
        %1492 = vmatpush.bf16.msra.mxu0 %v1205
        %1493 = vmatmul.bf16.gmra.mxu0 %v607
        %v1494 = vpop.f32.mrf.mxu0
        %v1495 = vadd.f32 %v1482, %v1494
        %v1496 = vpop.f32.mrf.mxu0
        %1497 = vdwg.mxu0
        %1498 = vmatpush.bf16.msra.mxu0 %v1198
        %1499 = vmatpush.bf16.msra.mxu0 %v1190
        %1500 = vmatpush.bf16.msra.mxu0 %v1182
        %1501 = vmatpush.bf16.msra.mxu0 %v1174
        %1502 = vmatpush.bf16.msra.mxu0 %v1166
        %1503 = vmatpush.bf16.msra.mxu0 %v1158
        %1504 = vmatpush.bf16.msra.mxu0 %v1150
        %1505 = vmatpush.bf16.msra.mxu0 %v1142
        %1506 = vmatmul.bf16.gmra.mxu0 %v606
        %v1507 = vpop.f32.mrf.mxu0
        %v1508 = vadd.f32 %v742, %v1507
        %v1509 = vpop.f32.mrf.mxu0
        %1510 = vdwg.mxu0
        %1511 = vmatpush.bf16.msra.mxu0 %v1262
        %1512 = vmatpush.bf16.msra.mxu0 %v1254
        %1513 = vmatpush.bf16.msra.mxu0 %v1246
        %1514 = vmatpush.bf16.msra.mxu0 %v1238
        %1515 = vmatpush.bf16.msra.mxu0 %v1230
        %1516 = vmatpush.bf16.msra.mxu0 %v1222
        %1517 = vmatpush.bf16.msra.mxu0 %v1214
        %1518 = vmatpush.bf16.msra.mxu0 %v1206
        %1519 = vmatmul.bf16.gmra.mxu0 %v607
        %v1520 = vpop.f32.mrf.mxu0
        %v1521 = vadd.f32 %v1508, %v1520
        %v1522 = vpop.f32.mrf.mxu0
        %1523 = vdwg.mxu0
        %1524 = vmatpush.bf16.msra.mxu0 %v1199
        %1525 = vmatpush.bf16.msra.mxu0 %v1191
        %1526 = vmatpush.bf16.msra.mxu0 %v1183
        %1527 = vmatpush.bf16.msra.mxu0 %v1175
        %1528 = vmatpush.bf16.msra.mxu0 %v1167
        %1529 = vmatpush.bf16.msra.mxu0 %v1159
        %1530 = vmatpush.bf16.msra.mxu0 %v1151
        %1531 = vmatpush.bf16.msra.mxu0 %v1143
        %1532 = vmatmul.bf16.gmra.mxu0 %v606
        %v1533 = vpop.f32.mrf.mxu0
        %v1534 = vadd.f32 %v743, %v1533
        %v1535 = vpop.f32.mrf.mxu0
        %1536 = vdwg.mxu0
        %1537 = vmatpush.bf16.msra.mxu0 %v1263
        %1538 = vmatpush.bf16.msra.mxu0 %v1255
        %1539 = vmatpush.bf16.msra.mxu0 %v1247
        %1540 = vmatpush.bf16.msra.mxu0 %v1239
        %1541 = vmatpush.bf16.msra.mxu0 %v1231
        %1542 = vmatpush.bf16.msra.mxu0 %v1223
        %1543 = vmatpush.bf16.msra.mxu0 %v1215
        %1544 = vmatpush.bf16.msra.mxu0 %v1207
        %1545 = vmatmul.bf16.gmra.mxu0 %v607
        %v1546 = vpop.f32.mrf.mxu0
        %v1547 = vadd.f32 %v1534, %v1546
        %v1548 = vpop.f32.mrf.mxu0
        %1549 = vdwg.mxu0
        %1550 = vmatpush.bf16.msra.mxu0 %v1200
        %1551 = vmatpush.bf16.msra.mxu0 %v1192
        %1552 = vmatpush.bf16.msra.mxu0 %v1184
        %1553 = vmatpush.bf16.msra.mxu0 %v1176
        %1554 = vmatpush.bf16.msra.mxu0 %v1168
        %1555 = vmatpush.bf16.msra.mxu0 %v1160
        %1556 = vmatpush.bf16.msra.mxu0 %v1152
        %1557 = vmatpush.bf16.msra.mxu0 %v1144
        %1558 = vmatmul.bf16.gmra.mxu0 %v606
        %v1559 = vpop.f32.mrf.mxu0
        %v1560 = vadd.f32 %v744, %v1559
        %v1561 = vpop.f32.mrf.mxu0
        %1562 = vdwg.mxu0
        %1563 = vmatpush.bf16.msra.mxu0 %v1264
        %1564 = vmatpush.bf16.msra.mxu0 %v1256
        %1565 = vmatpush.bf16.msra.mxu0 %v1248
        %1566 = vmatpush.bf16.msra.mxu0 %v1240
        %1567 = vmatpush.bf16.msra.mxu0 %v1232
        %1568 = vmatpush.bf16.msra.mxu0 %v1224
        %1569 = vmatpush.bf16.msra.mxu0 %v1216
        %1570 = vmatpush.bf16.msra.mxu0 %v1208
        %1571 = vmatmul.bf16.gmra.mxu0 %v607
        %v1572 = vpop.f32.mrf.mxu0
        %v1573 = vadd.f32 %v1560, %v1572
        %v1574 = vpop.f32.mrf.mxu0
        %1575 = vdwg.mxu0
        %1576 = vmatpush.bf16.msra.mxu0 %v1201
        %1577 = vmatpush.bf16.msra.mxu0 %v1193
        %1578 = vmatpush.bf16.msra.mxu0 %v1185
        %1579 = vmatpush.bf16.msra.mxu0 %v1177
        %1580 = vmatpush.bf16.msra.mxu0 %v1169
        %1581 = vmatpush.bf16.msra.mxu0 %v1161
        %1582 = vmatpush.bf16.msra.mxu0 %v1153
        %1583 = vmatpush.bf16.msra.mxu0 %v1145
        %1584 = vmatmul.bf16.gmra.mxu0 %v606
        %v1585 = vpop.f32.mrf.mxu0
        %v1586 = vadd.f32 %v745, %v1585
        %v1587 = vpop.f32.mrf.mxu0
        %1588 = vdwg.mxu0
        %1589 = vmatpush.bf16.msra.mxu0 %v1265
        %1590 = vmatpush.bf16.msra.mxu0 %v1257
        %1591 = vmatpush.bf16.msra.mxu0 %v1249
        %1592 = vmatpush.bf16.msra.mxu0 %v1241
        %1593 = vmatpush.bf16.msra.mxu0 %v1233
        %1594 = vmatpush.bf16.msra.mxu0 %v1225
        %1595 = vmatpush.bf16.msra.mxu0 %v1217
        %1596 = vmatpush.bf16.msra.mxu0 %v1209
        %1597 = vmatmul.bf16.gmra.mxu0 %v607
        %v1598 = vpop.f32.mrf.mxu0
        %v1599 = vadd.f32 %v1586, %v1598
        %v1600 = vpop.f32.mrf.mxu0
        %1601 = vdwg.mxu0
        %v1602 = vmax.f32 %v1417, 0.0
        %v1603 = vmax.f32 %v1443, 0.0
        %v1604 = vmax.f32 %v1469, 0.0
        %v1605 = vmax.f32 %v1495, 0.0
        %v1606 = vmax.f32 %v1521, 0.0
        %v1607 = vmax.f32 %v1547, 0.0
        %v1608 = vmax.f32 %v1573, 0.0
        %v1609 = vmax.f32 %v1599, 0.0
        %v1610 = vpack.c.bf16 %v1602, %v1602
        %v1611 = vpack.c.bf16 %v1603, %v1603
        %v1612 = vpack.c.bf16 %v1604, %v1604
        %v1613 = vpack.c.bf16 %v1605, %v1605
        %v1614 = vpack.c.bf16 %v1606, %v1606
        %v1615 = vpack.c.bf16 %v1607, %v1607
        %v1616 = vpack.c.bf16 %v1608, %v1608
        %v1617 = vpack.c.bf16 %v1609, %v1609
        %v1618 = vld [vmem:[%s494] sm:$0xff]
        %v1619 = vld [vmem:[%s494 + $0x8] sm:$0xff]
        %v1620 = vld [vmem:[%s494 + $0x10] sm:$0xff]
        %v1621 = vld [vmem:[%s494 + $0x18] sm:$0xff]
        %v1622 = vld [vmem:[%s494 + $0x20] sm:$0xff]
        %v1623 = vld [vmem:[%s494 + $0x28] sm:$0xff]
        %v1624 = vld [vmem:[%s494 + $0x30] sm:$0xff]
        %v1625 = vld [vmem:[%s494 + $0x38] sm:$0xff]
        %v1626 = vld [vmem:[%s494 + $0x40] sm:$0xff]
        %v1627 = vld [vmem:[%s494 + $0x48] sm:$0xff]
        %v1628 = vld [vmem:[%s494 + $0x50] sm:$0xff]
        %v1629 = vld [vmem:[%s494 + $0x58] sm:$0xff]
        %v1630 = vld [vmem:[%s494 + $0x60] sm:$0xff]
        %v1631 = vld [vmem:[%s494 + $0x68] sm:$0xff]
        %v1632 = vld [vmem:[%s494 + $0x70] sm:$0xff]
        %v1633 = vld [vmem:[%s494 + $0x78] sm:$0xff]
        %v1634 = vld [vmem:[%s494 + $0x80] sm:$0xff]
        %v1635 = vld [vmem:[%s494 + $0x88] sm:$0xff]
        %v1636 = vld [vmem:[%s494 + $0x90] sm:$0xff]
        %v1637 = vld [vmem:[%s494 + $0x98] sm:$0xff]
        %v1638 = vld [vmem:[%s494 + $0xa0] sm:$0xff]
        %v1639 = vld [vmem:[%s494 + $0xa8] sm:$0xff]
        %v1640 = vld [vmem:[%s494 + $0xb0] sm:$0xff]
        %v1641 = vld [vmem:[%s494 + $0xb8] sm:$0xff]
        %v1642 = vld [vmem:[%s494 + $0xc0] sm:$0xff]
        %v1643 = vld [vmem:[%s494 + $0xc8] sm:$0xff]
        %v1644 = vld [vmem:[%s494 + $0xd0] sm:$0xff]
        %v1645 = vld [vmem:[%s494 + $0xd8] sm:$0xff]
        %v1646 = vld [vmem:[%s494 + $0xe0] sm:$0xff]
        %v1647 = vld [vmem:[%s494 + $0xe8] sm:$0xff]
        %v1648 = vld [vmem:[%s494 + $0xf0] sm:$0xff]
        %v1649 = vld [vmem:[%s494 + $0xf8] sm:$0xff]
        %v1650 = vld [vmem:[%s494 + $0x100] sm:$0xff]
        %v1651 = vld [vmem:[%s494 + $0x108] sm:$0xff]
        %v1652 = vld [vmem:[%s494 + $0x110] sm:$0xff]
        %v1653 = vld [vmem:[%s494 + $0x118] sm:$0xff]
        %v1654 = vld [vmem:[%s494 + $0x120] sm:$0xff]
        %v1655 = vld [vmem:[%s494 + $0x128] sm:$0xff]
        %v1656 = vld [vmem:[%s494 + $0x130] sm:$0xff]
        %v1657 = vld [vmem:[%s494 + $0x138] sm:$0xff]
        %v1658 = vld [vmem:[%s494 + $0x140] sm:$0xff]
        %v1659 = vld [vmem:[%s494 + $0x148] sm:$0xff]
        %v1660 = vld [vmem:[%s494 + $0x150] sm:$0xff]
        %v1661 = vld [vmem:[%s494 + $0x158] sm:$0xff]
        %v1662 = vld [vmem:[%s494 + $0x160] sm:$0xff]
        %v1663 = vld [vmem:[%s494 + $0x168] sm:$0xff]
        %v1664 = vld [vmem:[%s494 + $0x170] sm:$0xff]
        %v1665 = vld [vmem:[%s494 + $0x178] sm:$0xff]
        %v1666 = vld [vmem:[%s494 + $0x180] sm:$0xff]
        %v1667 = vld [vmem:[%s494 + $0x188] sm:$0xff]
        %v1668 = vld [vmem:[%s494 + $0x190] sm:$0xff]
        %v1669 = vld [vmem:[%s494 + $0x198] sm:$0xff]
        %v1670 = vld [vmem:[%s494 + $0x1a0] sm:$0xff]
        %v1671 = vld [vmem:[%s494 + $0x1a8] sm:$0xff]
        %v1672 = vld [vmem:[%s494 + $0x1b0] sm:$0xff]
        %v1673 = vld [vmem:[%s494 + $0x1b8] sm:$0xff]
        %v1674 = vld [vmem:[%s494 + $0x1c0] sm:$0xff]
        %v1675 = vld [vmem:[%s494 + $0x1c8] sm:$0xff]
        %v1676 = vld [vmem:[%s494 + $0x1d0] sm:$0xff]
        %v1677 = vld [vmem:[%s494 + $0x1d8] sm:$0xff]
        %v1678 = vld [vmem:[%s494 + $0x1e0] sm:$0xff]
        %v1679 = vld [vmem:[%s494 + $0x1e8] sm:$0xff]
        %v1680 = vld [vmem:[%s494 + $0x1f0] sm:$0xff]
        %v1681 = vld [vmem:[%s494 + $0x1f8] sm:$0xff]
        %v1682 = vld [vmem:[%s504] sm:$0x3]
        %v1684 = vperm.slane %v1682, 0
        %v1685 = vperm.slane %v1682, 1
        %v1752 = vunpack.c.l.b16 %v1618
        %v1753 = vunpack.c.h.b16 %v1618
        %v1754 = vunpack.c.l.b16 %v1619
        %v1755 = vunpack.c.h.b16 %v1619
        %v1756 = vunpack.c.l.b16 %v1620
        %v1757 = vunpack.c.h.b16 %v1620
        %v1758 = vunpack.c.l.b16 %v1621
        %v1759 = vunpack.c.h.b16 %v1621
        %v1760 = vunpack.c.l.b16 %v1622
        %v1761 = vunpack.c.h.b16 %v1622
        %v1762 = vunpack.c.l.b16 %v1623
        %v1763 = vunpack.c.h.b16 %v1623
        %v1764 = vunpack.c.l.b16 %v1624
        %v1765 = vunpack.c.h.b16 %v1624
        %v1766 = vunpack.c.l.b16 %v1625
        %v1767 = vunpack.c.h.b16 %v1625
        %v1768 = vunpack.c.l.b16 %v1626
        %v1769 = vunpack.c.h.b16 %v1626
        %v1770 = vunpack.c.l.b16 %v1627
        %v1771 = vunpack.c.h.b16 %v1627
        %v1772 = vunpack.c.l.b16 %v1628
        %v1773 = vunpack.c.h.b16 %v1628
        %v1774 = vunpack.c.l.b16 %v1629
        %v1775 = vunpack.c.h.b16 %v1629
        %v1776 = vunpack.c.l.b16 %v1630
        %v1777 = vunpack.c.h.b16 %v1630
        %v1778 = vunpack.c.l.b16 %v1631
        %v1779 = vunpack.c.h.b16 %v1631
        %v1780 = vunpack.c.l.b16 %v1632
        %v1781 = vunpack.c.h.b16 %v1632
        %v1782 = vunpack.c.l.b16 %v1633
        %v1783 = vunpack.c.h.b16 %v1633
        %v1784 = vunpack.c.l.b16 %v1634
        %v1785 = vunpack.c.h.b16 %v1634
        %v1786 = vunpack.c.l.b16 %v1635
        %v1787 = vunpack.c.h.b16 %v1635
        %v1788 = vunpack.c.l.b16 %v1636
        %v1789 = vunpack.c.h.b16 %v1636
        %v1790 = vunpack.c.l.b16 %v1637
        %v1791 = vunpack.c.h.b16 %v1637
        %v1792 = vunpack.c.l.b16 %v1638
        %v1793 = vunpack.c.h.b16 %v1638
        %v1794 = vunpack.c.l.b16 %v1639
        %v1795 = vunpack.c.h.b16 %v1639
        %v1796 = vunpack.c.l.b16 %v1640
        %v1797 = vunpack.c.h.b16 %v1640
        %v1798 = vunpack.c.l.b16 %v1641
        %v1799 = vunpack.c.h.b16 %v1641
        %v1800 = vunpack.c.l.b16 %v1642
        %v1801 = vunpack.c.h.b16 %v1642
        %v1802 = vunpack.c.l.b16 %v1643
        %v1803 = vunpack.c.h.b16 %v1643
        %v1804 = vunpack.c.l.b16 %v1644
        %v1805 = vunpack.c.h.b16 %v1644
        %v1806 = vunpack.c.l.b16 %v1645
        %v1807 = vunpack.c.h.b16 %v1645
        %v1808 = vunpack.c.l.b16 %v1646
        %v1809 = vunpack.c.h.b16 %v1646
        %v1810 = vunpack.c.l.b16 %v1647
        %v1811 = vunpack.c.h.b16 %v1647
        %v1812 = vunpack.c.l.b16 %v1648
        %v1813 = vunpack.c.h.b16 %v1648
        %v1814 = vunpack.c.l.b16 %v1649
        %v1815 = vunpack.c.h.b16 %v1649
        %v1816 = vunpack.c.l.b16 %v1650
        %v1817 = vunpack.c.h.b16 %v1650
        %v1818 = vunpack.c.l.b16 %v1651
        %v1819 = vunpack.c.h.b16 %v1651
        %v1820 = vunpack.c.l.b16 %v1652
        %v1821 = vunpack.c.h.b16 %v1652
        %v1822 = vunpack.c.l.b16 %v1653
        %v1823 = vunpack.c.h.b16 %v1653
        %v1824 = vunpack.c.l.b16 %v1654
        %v1825 = vunpack.c.h.b16 %v1654
        %v1826 = vunpack.c.l.b16 %v1655
        %v1827 = vunpack.c.h.b16 %v1655
        %v1828 = vunpack.c.l.b16 %v1656
        %v1829 = vunpack.c.h.b16 %v1656
        %v1830 = vunpack.c.l.b16 %v1657
        %v1831 = vunpack.c.h.b16 %v1657
        %v1832 = vunpack.c.l.b16 %v1658
        %v1833 = vunpack.c.h.b16 %v1658
        %v1834 = vunpack.c.l.b16 %v1659
        %v1835 = vunpack.c.h.b16 %v1659
        %v1836 = vunpack.c.l.b16 %v1660
        %v1837 = vunpack.c.h.b16 %v1660
        %v1838 = vunpack.c.l.b16 %v1661
        %v1839 = vunpack.c.h.b16 %v1661
        %v1840 = vunpack.c.l.b16 %v1662
        %v1841 = vunpack.c.h.b16 %v1662
        %v1842 = vunpack.c.l.b16 %v1663
        %v1843 = vunpack.c.h.b16 %v1663
        %v1844 = vunpack.c.l.b16 %v1664
        %v1845 = vunpack.c.h.b16 %v1664
        %v1846 = vunpack.c.l.b16 %v1665
        %v1847 = vunpack.c.h.b16 %v1665
        %v1848 = vunpack.c.l.b16 %v1666
        %v1849 = vunpack.c.h.b16 %v1666
        %v1850 = vunpack.c.l.b16 %v1667
        %v1851 = vunpack.c.h.b16 %v1667
        %v1852 = vunpack.c.l.b16 %v1668
        %v1853 = vunpack.c.h.b16 %v1668
        %v1854 = vunpack.c.l.b16 %v1669
        %v1855 = vunpack.c.h.b16 %v1669
        %v1856 = vunpack.c.l.b16 %v1670
        %v1857 = vunpack.c.h.b16 %v1670
        %v1858 = vunpack.c.l.b16 %v1671
        %v1859 = vunpack.c.h.b16 %v1671
        %v1860 = vunpack.c.l.b16 %v1672
        %v1861 = vunpack.c.h.b16 %v1672
        %v1862 = vunpack.c.l.b16 %v1673
        %v1863 = vunpack.c.h.b16 %v1673
        %v1864 = vunpack.c.l.b16 %v1674
        %v1865 = vunpack.c.h.b16 %v1674
        %v1866 = vunpack.c.l.b16 %v1675
        %v1867 = vunpack.c.h.b16 %v1675
        %v1868 = vunpack.c.l.b16 %v1676
        %v1869 = vunpack.c.h.b16 %v1676
        %v1870 = vunpack.c.l.b16 %v1677
        %v1871 = vunpack.c.h.b16 %v1677
        %v1872 = vunpack.c.l.b16 %v1678
        %v1873 = vunpack.c.h.b16 %v1678
        %v1874 = vunpack.c.l.b16 %v1679
        %v1875 = vunpack.c.h.b16 %v1679
        %v1876 = vunpack.c.l.b16 %v1680
        %v1877 = vunpack.c.h.b16 %v1680
        %v1878 = vunpack.c.l.b16 %v1681
        %v1879 = vunpack.c.h.b16 %v1681
        %v1880 = vpack.c.b16 %v1754, %v1752
        %v1881 = vpack.c.b16 %v1755, %v1753
        %v1882 = vpack.c.b16 %v1758, %v1756
        %v1883 = vpack.c.b16 %v1759, %v1757
        %v1884 = vpack.c.b16 %v1762, %v1760
        %v1885 = vpack.c.b16 %v1763, %v1761
        %v1886 = vpack.c.b16 %v1766, %v1764
        %v1887 = vpack.c.b16 %v1767, %v1765
        %v1888 = vpack.c.b16 %v1770, %v1768
        %v1889 = vpack.c.b16 %v1771, %v1769
        %v1890 = vpack.c.b16 %v1774, %v1772
        %v1891 = vpack.c.b16 %v1775, %v1773
        %v1892 = vpack.c.b16 %v1778, %v1776
        %v1893 = vpack.c.b16 %v1779, %v1777
        %v1894 = vpack.c.b16 %v1782, %v1780
        %v1895 = vpack.c.b16 %v1783, %v1781
        %v1896 = vpack.c.b16 %v1786, %v1784
        %v1897 = vpack.c.b16 %v1787, %v1785
        %v1898 = vpack.c.b16 %v1790, %v1788
        %v1899 = vpack.c.b16 %v1791, %v1789
        %v1900 = vpack.c.b16 %v1794, %v1792
        %v1901 = vpack.c.b16 %v1795, %v1793
        %v1902 = vpack.c.b16 %v1798, %v1796
        %v1903 = vpack.c.b16 %v1799, %v1797
        %v1904 = vpack.c.b16 %v1802, %v1800
        %v1905 = vpack.c.b16 %v1803, %v1801
        %v1906 = vpack.c.b16 %v1806, %v1804
        %v1907 = vpack.c.b16 %v1807, %v1805
        %v1908 = vpack.c.b16 %v1810, %v1808
        %v1909 = vpack.c.b16 %v1811, %v1809
        %v1910 = vpack.c.b16 %v1814, %v1812
        %v1911 = vpack.c.b16 %v1815, %v1813
        %v1912 = vpack.c.b16 %v1818, %v1816
        %v1913 = vpack.c.b16 %v1819, %v1817
        %v1914 = vpack.c.b16 %v1822, %v1820
        %v1915 = vpack.c.b16 %v1823, %v1821
        %v1916 = vpack.c.b16 %v1826, %v1824
        %v1917 = vpack.c.b16 %v1827, %v1825
        %v1918 = vpack.c.b16 %v1830, %v1828
        %v1919 = vpack.c.b16 %v1831, %v1829
        %v1920 = vpack.c.b16 %v1834, %v1832
        %v1921 = vpack.c.b16 %v1835, %v1833
        %v1922 = vpack.c.b16 %v1838, %v1836
        %v1923 = vpack.c.b16 %v1839, %v1837
        %v1924 = vpack.c.b16 %v1842, %v1840
        %v1925 = vpack.c.b16 %v1843, %v1841
        %v1926 = vpack.c.b16 %v1846, %v1844
        %v1927 = vpack.c.b16 %v1847, %v1845
        %v1928 = vpack.c.b16 %v1850, %v1848
        %v1929 = vpack.c.b16 %v1851, %v1849
        %v1930 = vpack.c.b16 %v1854, %v1852
        %v1931 = vpack.c.b16 %v1855, %v1853
        %v1932 = vpack.c.b16 %v1858, %v1856
        %v1933 = vpack.c.b16 %v1859, %v1857
        %v1934 = vpack.c.b16 %v1862, %v1860
        %v1935 = vpack.c.b16 %v1863, %v1861
        %v1936 = vpack.c.b16 %v1866, %v1864
        %v1937 = vpack.c.b16 %v1867, %v1865
        %v1938 = vpack.c.b16 %v1870, %v1868
        %v1939 = vpack.c.b16 %v1871, %v1869
        %v1940 = vpack.c.b16 %v1874, %v1872
        %v1941 = vpack.c.b16 %v1875, %v1873
        %v1942 = vpack.c.b16 %v1878, %v1876
        %v1943 = vpack.c.b16 %v1879, %v1877
        %2008 = vmatpush.bf16.msra.mxu0 %v1894
        %2009 = vmatpush.bf16.msra.mxu0 %v1892
        %2010 = vmatpush.bf16.msra.mxu0 %v1890
        %2011 = vmatpush.bf16.msra.mxu0 %v1888
        %2012 = vmatpush.bf16.msra.mxu0 %v1886
        %2013 = vmatpush.bf16.msra.mxu0 %v1884
        %2014 = vmatpush.bf16.msra.mxu0 %v1882
        %2015 = vmatpush.bf16.msra.mxu0 %v1880
        %2016 = vmatmul.bf16.gmra.mxu0 %v1610
        %v2017 = vpop.f32.mrf.mxu0
        %v2018 = vadd.f32 %v1684, %v2017
        %v2019 = vpop.f32.mrf.mxu0
        %2020 = vdwg.mxu0
        %2021 = vmatpush.bf16.msra.mxu0 %v1910
        %2022 = vmatpush.bf16.msra.mxu0 %v1908
        %2023 = vmatpush.bf16.msra.mxu0 %v1906
        %2024 = vmatpush.bf16.msra.mxu0 %v1904
        %2025 = vmatpush.bf16.msra.mxu0 %v1902
        %2026 = vmatpush.bf16.msra.mxu0 %v1900
        %2027 = vmatpush.bf16.msra.mxu0 %v1898
        %2028 = vmatpush.bf16.msra.mxu0 %v1896
        %2029 = vmatmul.bf16.gmra.mxu0 %v1611
        %v2030 = vpop.f32.mrf.mxu0
        %v2031 = vadd.f32 %v2018, %v2030
        %v2032 = vpop.f32.mrf.mxu0
        %2033 = vdwg.mxu0
        %2034 = vmatpush.bf16.msra.mxu0 %v1926
        %2035 = vmatpush.bf16.msra.mxu0 %v1924
        %2036 = vmatpush.bf16.msra.mxu0 %v1922
        %2037 = vmatpush.bf16.msra.mxu0 %v1920
        %2038 = vmatpush.bf16.msra.mxu0 %v1918
        %2039 = vmatpush.bf16.msra.mxu0 %v1916
        %2040 = vmatpush.bf16.msra.mxu0 %v1914
        %2041 = vmatpush.bf16.msra.mxu0 %v1912
        %2042 = vmatmul.bf16.gmra.mxu0 %v1612
        %v2043 = vpop.f32.mrf.mxu0
        %v2044 = vadd.f32 %v2031, %v2043
        %v2045 = vpop.f32.mrf.mxu0
        %2046 = vdwg.mxu0
        %2047 = vmatpush.bf16.msra.mxu0 %v1942
        %2048 = vmatpush.bf16.msra.mxu0 %v1940
        %2049 = vmatpush.bf16.msra.mxu0 %v1938
        %2050 = vmatpush.bf16.msra.mxu0 %v1936
        %2051 = vmatpush.bf16.msra.mxu0 %v1934
        %2052 = vmatpush.bf16.msra.mxu0 %v1932
        %2053 = vmatpush.bf16.msra.mxu0 %v1930
        %2054 = vmatpush.bf16.msra.mxu0 %v1928
        %2055 = vmatmul.bf16.gmra.mxu0 %v1613
        %v2056 = vpop.f32.mrf.mxu0
        %v2057 = vadd.f32 %v2044, %v2056
        %v2058 = vpop.f32.mrf.mxu0
        %2059 = vdwg.mxu0
        %2060 = vmatpush.bf16.msra.mxu0 %v1895
        %2061 = vmatpush.bf16.msra.mxu0 %v1893
        %2062 = vmatpush.bf16.msra.mxu0 %v1891
        %2063 = vmatpush.bf16.msra.mxu0 %v1889
        %2064 = vmatpush.bf16.msra.mxu0 %v1887
        %2065 = vmatpush.bf16.msra.mxu0 %v1885
        %2066 = vmatpush.bf16.msra.mxu0 %v1883
        %2067 = vmatpush.bf16.msra.mxu0 %v1881
        %2068 = vmatmul.bf16.gmra.mxu0 %v1610
        %v2069 = vpop.f32.mrf.mxu0
        %v2070 = vadd.f32 %v1685, %v2069
        %v2071 = vpop.f32.mrf.mxu0
        %2072 = vdwg.mxu0
        %2073 = vmatpush.bf16.msra.mxu0 %v1911
        %2074 = vmatpush.bf16.msra.mxu0 %v1909
        %2075 = vmatpush.bf16.msra.mxu0 %v1907
        %2076 = vmatpush.bf16.msra.mxu0 %v1905
        %2077 = vmatpush.bf16.msra.mxu0 %v1903
        %2078 = vmatpush.bf16.msra.mxu0 %v1901
        %2079 = vmatpush.bf16.msra.mxu0 %v1899
        %2080 = vmatpush.bf16.msra.mxu0 %v1897
        %2081 = vmatmul.bf16.gmra.mxu0 %v1611
        %v2082 = vpop.f32.mrf.mxu0
        %v2083 = vadd.f32 %v2070, %v2082
        %v2084 = vpop.f32.mrf.mxu0
        %2085 = vdwg.mxu0
        %2086 = vmatpush.bf16.msra.mxu0 %v1927
        %2087 = vmatpush.bf16.msra.mxu0 %v1925
        %2088 = vmatpush.bf16.msra.mxu0 %v1923
        %2089 = vmatpush.bf16.msra.mxu0 %v1921
        %2090 = vmatpush.bf16.msra.mxu0 %v1919
        %2091 = vmatpush.bf16.msra.mxu0 %v1917
        %2092 = vmatpush.bf16.msra.mxu0 %v1915
        %2093 = vmatpush.bf16.msra.mxu0 %v1913
        %2094 = vmatmul.bf16.gmra.mxu0 %v1612
        %v2095 = vpop.f32.mrf.mxu0
        %v2096 = vadd.f32 %v2083, %v2095
        %v2097 = vpop.f32.mrf.mxu0
        %2098 = vdwg.mxu0
        %2099 = vmatpush.bf16.msra.mxu0 %v1943
        %2100 = vmatpush.bf16.msra.mxu0 %v1941
        %2101 = vmatpush.bf16.msra.mxu0 %v1939
        %2102 = vmatpush.bf16.msra.mxu0 %v1937
        %2103 = vmatpush.bf16.msra.mxu0 %v1935
        %2104 = vmatpush.bf16.msra.mxu0 %v1933
        %2105 = vmatpush.bf16.msra.mxu0 %v1931
        %2106 = vmatpush.bf16.msra.mxu0 %v1929
        %2107 = vmatmul.bf16.gmra.mxu0 %v1613
        %v2108 = vpop.f32.mrf.mxu0
        %v2109 = vadd.f32 %v2096, %v2108
        %v2110 = vpop.f32.mrf.mxu0
        %2111 = vdwg.mxu0
        %v2112 = vld [vmem:[%s514] sm:$0xff]
        %v2113 = vld [vmem:[%s514 + $0x8] sm:$0xff]
        %v2114 = vld [vmem:[%s514 + $0x10] sm:$0xff]
        %v2115 = vld [vmem:[%s514 + $0x18] sm:$0xff]
        %v2116 = vld [vmem:[%s514 + $0x20] sm:$0xff]
        %v2117 = vld [vmem:[%s514 + $0x28] sm:$0xff]
        %v2118 = vld [vmem:[%s514 + $0x30] sm:$0xff]
        %v2119 = vld [vmem:[%s514 + $0x38] sm:$0xff]
        %v2120 = vld [vmem:[%s514 + $0x40] sm:$0xff]
        %v2121 = vld [vmem:[%s514 + $0x48] sm:$0xff]
        %v2122 = vld [vmem:[%s514 + $0x50] sm:$0xff]
        %v2123 = vld [vmem:[%s514 + $0x58] sm:$0xff]
        %v2124 = vld [vmem:[%s514 + $0x60] sm:$0xff]
        %v2125 = vld [vmem:[%s514 + $0x68] sm:$0xff]
        %v2126 = vld [vmem:[%s514 + $0x70] sm:$0xff]
        %v2127 = vld [vmem:[%s514 + $0x78] sm:$0xff]
        %v2128 = vld [vmem:[%s514 + $0x80] sm:$0xff]
        %v2129 = vld [vmem:[%s514 + $0x88] sm:$0xff]
        %v2130 = vld [vmem:[%s514 + $0x90] sm:$0xff]
        %v2131 = vld [vmem:[%s514 + $0x98] sm:$0xff]
        %v2132 = vld [vmem:[%s514 + $0xa0] sm:$0xff]
        %v2133 = vld [vmem:[%s514 + $0xa8] sm:$0xff]
        %v2134 = vld [vmem:[%s514 + $0xb0] sm:$0xff]
        %v2135 = vld [vmem:[%s514 + $0xb8] sm:$0xff]
        %v2136 = vld [vmem:[%s514 + $0xc0] sm:$0xff]
        %v2137 = vld [vmem:[%s514 + $0xc8] sm:$0xff]
        %v2138 = vld [vmem:[%s514 + $0xd0] sm:$0xff]
        %v2139 = vld [vmem:[%s514 + $0xd8] sm:$0xff]
        %v2140 = vld [vmem:[%s514 + $0xe0] sm:$0xff]
        %v2141 = vld [vmem:[%s514 + $0xe8] sm:$0xff]
        %v2142 = vld [vmem:[%s514 + $0xf0] sm:$0xff]
        %v2143 = vld [vmem:[%s514 + $0xf8] sm:$0xff]
        %v2144 = vld [vmem:[%s514 + $0x100] sm:$0xff]
        %v2145 = vld [vmem:[%s514 + $0x108] sm:$0xff]
        %v2146 = vld [vmem:[%s514 + $0x110] sm:$0xff]
        %v2147 = vld [vmem:[%s514 + $0x118] sm:$0xff]
        %v2148 = vld [vmem:[%s514 + $0x120] sm:$0xff]
        %v2149 = vld [vmem:[%s514 + $0x128] sm:$0xff]
        %v2150 = vld [vmem:[%s514 + $0x130] sm:$0xff]
        %v2151 = vld [vmem:[%s514 + $0x138] sm:$0xff]
        %v2152 = vld [vmem:[%s514 + $0x140] sm:$0xff]
        %v2153 = vld [vmem:[%s514 + $0x148] sm:$0xff]
        %v2154 = vld [vmem:[%s514 + $0x150] sm:$0xff]
        %v2155 = vld [vmem:[%s514 + $0x158] sm:$0xff]
        %v2156 = vld [vmem:[%s514 + $0x160] sm:$0xff]
        %v2157 = vld [vmem:[%s514 + $0x168] sm:$0xff]
        %v2158 = vld [vmem:[%s514 + $0x170] sm:$0xff]
        %v2159 = vld [vmem:[%s514 + $0x178] sm:$0xff]
        %v2160 = vld [vmem:[%s514 + $0x180] sm:$0xff]
        %v2161 = vld [vmem:[%s514 + $0x188] sm:$0xff]
        %v2162 = vld [vmem:[%s514 + $0x190] sm:$0xff]
        %v2163 = vld [vmem:[%s514 + $0x198] sm:$0xff]
        %v2164 = vld [vmem:[%s514 + $0x1a0] sm:$0xff]
        %v2165 = vld [vmem:[%s514 + $0x1a8] sm:$0xff]
        %v2166 = vld [vmem:[%s514 + $0x1b0] sm:$0xff]
        %v2167 = vld [vmem:[%s514 + $0x1b8] sm:$0xff]
        %v2168 = vld [vmem:[%s514 + $0x1c0] sm:$0xff]
        %v2169 = vld [vmem:[%s514 + $0x1c8] sm:$0xff]
        %v2170 = vld [vmem:[%s514 + $0x1d0] sm:$0xff]
        %v2171 = vld [vmem:[%s514 + $0x1d8] sm:$0xff]
        %v2172 = vld [vmem:[%s514 + $0x1e0] sm:$0xff]
        %v2173 = vld [vmem:[%s514 + $0x1e8] sm:$0xff]
        %v2174 = vld [vmem:[%s514 + $0x1f0] sm:$0xff]
        %v2175 = vld [vmem:[%s514 + $0x1f8] sm:$0xff]
        %v2176 = vld [vmem:[%s524] sm:$0x3]
        %v2178 = vperm.slane %v2176, 0
        %v2179 = vperm.slane %v2176, 1
        %v2246 = vunpack.c.l.b16 %v2112
        %v2247 = vunpack.c.h.b16 %v2112
        %v2248 = vunpack.c.l.b16 %v2113
        %v2249 = vunpack.c.h.b16 %v2113
        %v2250 = vunpack.c.l.b16 %v2114
        %v2251 = vunpack.c.h.b16 %v2114
        %v2252 = vunpack.c.l.b16 %v2115
        %v2253 = vunpack.c.h.b16 %v2115
        %v2254 = vunpack.c.l.b16 %v2116
        %v2255 = vunpack.c.h.b16 %v2116
        %v2256 = vunpack.c.l.b16 %v2117
        %v2257 = vunpack.c.h.b16 %v2117
        %v2258 = vunpack.c.l.b16 %v2118
        %v2259 = vunpack.c.h.b16 %v2118
        %v2260 = vunpack.c.l.b16 %v2119
        %v2261 = vunpack.c.h.b16 %v2119
        %v2262 = vunpack.c.l.b16 %v2120
        %v2263 = vunpack.c.h.b16 %v2120
        %v2264 = vunpack.c.l.b16 %v2121
        %v2265 = vunpack.c.h.b16 %v2121
        %v2266 = vunpack.c.l.b16 %v2122
        %v2267 = vunpack.c.h.b16 %v2122
        %v2268 = vunpack.c.l.b16 %v2123
        %v2269 = vunpack.c.h.b16 %v2123
        %v2270 = vunpack.c.l.b16 %v2124
        %v2271 = vunpack.c.h.b16 %v2124
        %v2272 = vunpack.c.l.b16 %v2125
        %v2273 = vunpack.c.h.b16 %v2125
        %v2274 = vunpack.c.l.b16 %v2126
        %v2275 = vunpack.c.h.b16 %v2126
        %v2276 = vunpack.c.l.b16 %v2127
        %v2277 = vunpack.c.h.b16 %v2127
        %v2278 = vunpack.c.l.b16 %v2128
        %v2279 = vunpack.c.h.b16 %v2128
        %v2280 = vunpack.c.l.b16 %v2129
        %v2281 = vunpack.c.h.b16 %v2129
        %v2282 = vunpack.c.l.b16 %v2130
        %v2283 = vunpack.c.h.b16 %v2130
        %v2284 = vunpack.c.l.b16 %v2131
        %v2285 = vunpack.c.h.b16 %v2131
        %v2286 = vunpack.c.l.b16 %v2132
        %v2287 = vunpack.c.h.b16 %v2132
        %v2288 = vunpack.c.l.b16 %v2133
        %v2289 = vunpack.c.h.b16 %v2133
        %v2290 = vunpack.c.l.b16 %v2134
        %v2291 = vunpack.c.h.b16 %v2134
        %v2292 = vunpack.c.l.b16 %v2135
        %v2293 = vunpack.c.h.b16 %v2135
        %v2294 = vunpack.c.l.b16 %v2136
        %v2295 = vunpack.c.h.b16 %v2136
        %v2296 = vunpack.c.l.b16 %v2137
        %v2297 = vunpack.c.h.b16 %v2137
        %v2298 = vunpack.c.l.b16 %v2138
        %v2299 = vunpack.c.h.b16 %v2138
        %v2300 = vunpack.c.l.b16 %v2139
        %v2301 = vunpack.c.h.b16 %v2139
        %v2302 = vunpack.c.l.b16 %v2140
        %v2303 = vunpack.c.h.b16 %v2140
        %v2304 = vunpack.c.l.b16 %v2141
        %v2305 = vunpack.c.h.b16 %v2141
        %v2306 = vunpack.c.l.b16 %v2142
        %v2307 = vunpack.c.h.b16 %v2142
        %v2308 = vunpack.c.l.b16 %v2143
        %v2309 = vunpack.c.h.b16 %v2143
        %v2310 = vunpack.c.l.b16 %v2144
        %v2311 = vunpack.c.h.b16 %v2144
        %v2312 = vunpack.c.l.b16 %v2145
        %v2313 = vunpack.c.h.b16 %v2145
        %v2314 = vunpack.c.l.b16 %v2146
        %v2315 = vunpack.c.h.b16 %v2146
        %v2316 = vunpack.c.l.b16 %v2147
        %v2317 = vunpack.c.h.b16 %v2147
        %v2318 = vunpack.c.l.b16 %v2148
        %v2319 = vunpack.c.h.b16 %v2148
        %v2320 = vunpack.c.l.b16 %v2149
        %v2321 = vunpack.c.h.b16 %v2149
        %v2322 = vunpack.c.l.b16 %v2150
        %v2323 = vunpack.c.h.b16 %v2150
        %v2324 = vunpack.c.l.b16 %v2151
        %v2325 = vunpack.c.h.b16 %v2151
        %v2326 = vunpack.c.l.b16 %v2152
        %v2327 = vunpack.c.h.b16 %v2152
        %v2328 = vunpack.c.l.b16 %v2153
        %v2329 = vunpack.c.h.b16 %v2153
        %v2330 = vunpack.c.l.b16 %v2154
        %v2331 = vunpack.c.h.b16 %v2154
        %v2332 = vunpack.c.l.b16 %v2155
        %v2333 = vunpack.c.h.b16 %v2155
        %v2334 = vunpack.c.l.b16 %v2156
        %v2335 = vunpack.c.h.b16 %v2156
        %v2336 = vunpack.c.l.b16 %v2157
        %v2337 = vunpack.c.h.b16 %v2157
        %v2338 = vunpack.c.l.b16 %v2158
        %v2339 = vunpack.c.h.b16 %v2158
        %v2340 = vunpack.c.l.b16 %v2159
        %v2341 = vunpack.c.h.b16 %v2159
        %v2342 = vunpack.c.l.b16 %v2160
        %v2343 = vunpack.c.h.b16 %v2160
        %v2344 = vunpack.c.l.b16 %v2161
        %v2345 = vunpack.c.h.b16 %v2161
        %v2346 = vunpack.c.l.b16 %v2162
        %v2347 = vunpack.c.h.b16 %v2162
        %v2348 = vunpack.c.l.b16 %v2163
        %v2349 = vunpack.c.h.b16 %v2163
        %v2350 = vunpack.c.l.b16 %v2164
        %v2351 = vunpack.c.h.b16 %v2164
        %v2352 = vunpack.c.l.b16 %v2165
        %v2353 = vunpack.c.h.b16 %v2165
        %v2354 = vunpack.c.l.b16 %v2166
        %v2355 = vunpack.c.h.b16 %v2166
        %v2356 = vunpack.c.l.b16 %v2167
        %v2357 = vunpack.c.h.b16 %v2167
        %v2358 = vunpack.c.l.b16 %v2168
        %v2359 = vunpack.c.h.b16 %v2168
        %v2360 = vunpack.c.l.b16 %v2169
        %v2361 = vunpack.c.h.b16 %v2169
        %v2362 = vunpack.c.l.b16 %v2170
        %v2363 = vunpack.c.h.b16 %v2170
        %v2364 = vunpack.c.l.b16 %v2171
        %v2365 = vunpack.c.h.b16 %v2171
        %v2366 = vunpack.c.l.b16 %v2172
        %v2367 = vunpack.c.h.b16 %v2172
        %v2368 = vunpack.c.l.b16 %v2173
        %v2369 = vunpack.c.h.b16 %v2173
        %v2370 = vunpack.c.l.b16 %v2174
        %v2371 = vunpack.c.h.b16 %v2174
        %v2372 = vunpack.c.l.b16 %v2175
        %v2373 = vunpack.c.h.b16 %v2175
        %v2374 = vpack.c.b16 %v2248, %v2246
        %v2375 = vpack.c.b16 %v2249, %v2247
        %v2376 = vpack.c.b16 %v2252, %v2250
        %v2377 = vpack.c.b16 %v2253, %v2251
        %v2378 = vpack.c.b16 %v2256, %v2254
        %v2379 = vpack.c.b16 %v2257, %v2255
        %v2380 = vpack.c.b16 %v2260, %v2258
        %v2381 = vpack.c.b16 %v2261, %v2259
        %v2382 = vpack.c.b16 %v2264, %v2262
        %v2383 = vpack.c.b16 %v2265, %v2263
        %v2384 = vpack.c.b16 %v2268, %v2266
        %v2385 = vpack.c.b16 %v2269, %v2267
        %v2386 = vpack.c.b16 %v2272, %v2270
        %v2387 = vpack.c.b16 %v2273, %v2271
        %v2388 = vpack.c.b16 %v2276, %v2274
        %v2389 = vpack.c.b16 %v2277, %v2275
        %v2390 = vpack.c.b16 %v2280, %v2278
        %v2391 = vpack.c.b16 %v2281, %v2279
        %v2392 = vpack.c.b16 %v2284, %v2282
        %v2393 = vpack.c.b16 %v2285, %v2283
        %v2394 = vpack.c.b16 %v2288, %v2286
        %v2395 = vpack.c.b16 %v2289, %v2287
        %v2396 = vpack.c.b16 %v2292, %v2290
        %v2397 = vpack.c.b16 %v2293, %v2291
        %v2398 = vpack.c.b16 %v2296, %v2294
        %v2399 = vpack.c.b16 %v2297, %v2295
        %v2400 = vpack.c.b16 %v2300, %v2298
        %v2401 = vpack.c.b16 %v2301, %v2299
        %v2402 = vpack.c.b16 %v2304, %v2302
        %v2403 = vpack.c.b16 %v2305, %v2303
        %v2404 = vpack.c.b16 %v2308, %v2306
        %v2405 = vpack.c.b16 %v2309, %v2307
        %v2406 = vpack.c.b16 %v2312, %v2310
        %v2407 = vpack.c.b16 %v2313, %v2311
        %v2408 = vpack.c.b16 %v2316, %v2314
        %v2409 = vpack.c.b16 %v2317, %v2315
        %v2410 = vpack.c.b16 %v2320, %v2318
        %v2411 = vpack.c.b16 %v2321, %v2319
        %v2412 = vpack.c.b16 %v2324, %v2322
        %v2413 = vpack.c.b16 %v2325, %v2323
        %v2414 = vpack.c.b16 %v2328, %v2326
        %v2415 = vpack.c.b16 %v2329, %v2327
        %v2416 = vpack.c.b16 %v2332, %v2330
        %v2417 = vpack.c.b16 %v2333, %v2331
        %v2418 = vpack.c.b16 %v2336, %v2334
        %v2419 = vpack.c.b16 %v2337, %v2335
        %v2420 = vpack.c.b16 %v2340, %v2338
        %v2421 = vpack.c.b16 %v2341, %v2339
        %v2422 = vpack.c.b16 %v2344, %v2342
        %v2423 = vpack.c.b16 %v2345, %v2343
        %v2424 = vpack.c.b16 %v2348, %v2346
        %v2425 = vpack.c.b16 %v2349, %v2347
        %v2426 = vpack.c.b16 %v2352, %v2350
        %v2427 = vpack.c.b16 %v2353, %v2351
        %v2428 = vpack.c.b16 %v2356, %v2354
        %v2429 = vpack.c.b16 %v2357, %v2355
        %v2430 = vpack.c.b16 %v2360, %v2358
        %v2431 = vpack.c.b16 %v2361, %v2359
        %v2432 = vpack.c.b16 %v2364, %v2362
        %v2433 = vpack.c.b16 %v2365, %v2363
        %v2434 = vpack.c.b16 %v2368, %v2366
        %v2435 = vpack.c.b16 %v2369, %v2367
        %v2436 = vpack.c.b16 %v2372, %v2370
        %v2437 = vpack.c.b16 %v2373, %v2371
        %2502 = vmatpush.bf16.msra.mxu0 %v2388
        %2503 = vmatpush.bf16.msra.mxu0 %v2386
        %2504 = vmatpush.bf16.msra.mxu0 %v2384
        %2505 = vmatpush.bf16.msra.mxu0 %v2382
        %2506 = vmatpush.bf16.msra.mxu0 %v2380
        %2507 = vmatpush.bf16.msra.mxu0 %v2378
        %2508 = vmatpush.bf16.msra.mxu0 %v2376
        %2509 = vmatpush.bf16.msra.mxu0 %v2374
        %2510 = vmatmul.bf16.gmra.mxu0 %v1614
        %v2511 = vpop.f32.mrf.mxu0
        %v2512 = vadd.f32 %v2178, %v2511
        %v2513 = vpop.f32.mrf.mxu0
        %2514 = vdwg.mxu0
        %2515 = vmatpush.bf16.msra.mxu0 %v2404
        %2516 = vmatpush.bf16.msra.mxu0 %v2402
        %2517 = vmatpush.bf16.msra.mxu0 %v2400
        %2518 = vmatpush.bf16.msra.mxu0 %v2398
        %2519 = vmatpush.bf16.msra.mxu0 %v2396
        %2520 = vmatpush.bf16.msra.mxu0 %v2394
        %2521 = vmatpush.bf16.msra.mxu0 %v2392
        %2522 = vmatpush.bf16.msra.mxu0 %v2390
        %2523 = vmatmul.bf16.gmra.mxu0 %v1615
        %v2524 = vpop.f32.mrf.mxu0
        %v2525 = vadd.f32 %v2512, %v2524
        %v2526 = vpop.f32.mrf.mxu0
        %2527 = vdwg.mxu0
        %2528 = vmatpush.bf16.msra.mxu0 %v2420
        %2529 = vmatpush.bf16.msra.mxu0 %v2418
        %2530 = vmatpush.bf16.msra.mxu0 %v2416
        %2531 = vmatpush.bf16.msra.mxu0 %v2414
        %2532 = vmatpush.bf16.msra.mxu0 %v2412
        %2533 = vmatpush.bf16.msra.mxu0 %v2410
        %2534 = vmatpush.bf16.msra.mxu0 %v2408
        %2535 = vmatpush.bf16.msra.mxu0 %v2406
        %2536 = vmatmul.bf16.gmra.mxu0 %v1616
        %v2537 = vpop.f32.mrf.mxu0
        %v2538 = vadd.f32 %v2525, %v2537
        %v2539 = vpop.f32.mrf.mxu0
        %2540 = vdwg.mxu0
        %2541 = vmatpush.bf16.msra.mxu0 %v2436
        %2542 = vmatpush.bf16.msra.mxu0 %v2434
        %2543 = vmatpush.bf16.msra.mxu0 %v2432
        %2544 = vmatpush.bf16.msra.mxu0 %v2430
        %2545 = vmatpush.bf16.msra.mxu0 %v2428
        %2546 = vmatpush.bf16.msra.mxu0 %v2426
        %2547 = vmatpush.bf16.msra.mxu0 %v2424
        %2548 = vmatpush.bf16.msra.mxu0 %v2422
        %2549 = vmatmul.bf16.gmra.mxu0 %v1617
        %v2550 = vpop.f32.mrf.mxu0
        %v2551 = vadd.f32 %v2538, %v2550
        %v2552 = vpop.f32.mrf.mxu0
        %2553 = vdwg.mxu0
        %2554 = vmatpush.bf16.msra.mxu0 %v2389
        %2555 = vmatpush.bf16.msra.mxu0 %v2387
        %2556 = vmatpush.bf16.msra.mxu0 %v2385
        %2557 = vmatpush.bf16.msra.mxu0 %v2383
        %2558 = vmatpush.bf16.msra.mxu0 %v2381
        %2559 = vmatpush.bf16.msra.mxu0 %v2379
        %2560 = vmatpush.bf16.msra.mxu0 %v2377
        %2561 = vmatpush.bf16.msra.mxu0 %v2375
        %2562 = vmatmul.bf16.gmra.mxu0 %v1614
        %v2563 = vpop.f32.mrf.mxu0
        %v2564 = vadd.f32 %v2179, %v2563
        %v2565 = vpop.f32.mrf.mxu0
        %2566 = vdwg.mxu0
        %2567 = vmatpush.bf16.msra.mxu0 %v2405
        %2568 = vmatpush.bf16.msra.mxu0 %v2403
        %2569 = vmatpush.bf16.msra.mxu0 %v2401
        %2570 = vmatpush.bf16.msra.mxu0 %v2399
        %2571 = vmatpush.bf16.msra.mxu0 %v2397
        %2572 = vmatpush.bf16.msra.mxu0 %v2395
        %2573 = vmatpush.bf16.msra.mxu0 %v2393
        %2574 = vmatpush.bf16.msra.mxu0 %v2391
        %2575 = vmatmul.bf16.gmra.mxu0 %v1615
        %v2576 = vpop.f32.mrf.mxu0
        %v2577 = vadd.f32 %v2564, %v2576
        %v2578 = vpop.f32.mrf.mxu0
        %2579 = vdwg.mxu0
        %2580 = vmatpush.bf16.msra.mxu0 %v2421
        %2581 = vmatpush.bf16.msra.mxu0 %v2419
        %2582 = vmatpush.bf16.msra.mxu0 %v2417
        %2583 = vmatpush.bf16.msra.mxu0 %v2415
        %2584 = vmatpush.bf16.msra.mxu0 %v2413
        %2585 = vmatpush.bf16.msra.mxu0 %v2411
        %2586 = vmatpush.bf16.msra.mxu0 %v2409
        %2587 = vmatpush.bf16.msra.mxu0 %v2407
        %2588 = vmatmul.bf16.gmra.mxu0 %v1616
        %v2589 = vpop.f32.mrf.mxu0
        %v2590 = vadd.f32 %v2577, %v2589
        %v2591 = vpop.f32.mrf.mxu0
        %2592 = vdwg.mxu0
        %2593 = vmatpush.bf16.msra.mxu0 %v2437
        %2594 = vmatpush.bf16.msra.mxu0 %v2435
        %2595 = vmatpush.bf16.msra.mxu0 %v2433
        %2596 = vmatpush.bf16.msra.mxu0 %v2431
        %2597 = vmatpush.bf16.msra.mxu0 %v2429
        %2598 = vmatpush.bf16.msra.mxu0 %v2427
        %2599 = vmatpush.bf16.msra.mxu0 %v2425
        %2600 = vmatpush.bf16.msra.mxu0 %v2423
        %2601 = vmatmul.bf16.gmra.mxu0 %v1617
        %v2602 = vpop.f32.mrf.mxu0
        %v2603 = vadd.f32 %v2590, %v2602
        %v2604 = vpop.f32.mrf.mxu0
        %2605 = vdwg.mxu0
        %v2606 = vtanh.pop %v2057
        %v2607 = vtanh.pop %v2109
        %v2609 = vperm.slane %v598, 0
        %v2610 = vperm.slane %v598, 1
        %v2613 = vmul.f32 %v2606, %v2609
        %v2614 = vmul.f32 %v2607, %v2610
        %v2615 = vmul.f32 %v2551, %v2609
        %v2616 = vmul.f32 %v2603, %v2610
        %v2617 = vmul.f32 %v2613, 1.442695
        %v2618 = vpow.pop %v2617
        %v2619 = vmul.f32 %v2614, 1.442695
        %v2620 = vpow.pop %v2619
        %v2621 = vmul.f32 %v595, %v2618
        %v2622 = vmul.f32 %v596, %v2620
        %v2623 = vadd.f32 %v2621, %v2615
        %v2624 = vadd.f32 %v2622, %v2616
        %v2625 = vmul.f32 %v2609, %v2623
        %v2626 = vmul.f32 %v2610, %v2624
        %v2627 = vadd.f32 %v604, %v2625
        %v2628 = vadd.f32 %v605, %v2626
        %2629 = vst [vmem:[#allocation16] sm:$0xff] %v2627
        %2630 = vst [vmem:[#allocation16 + $0x8] sm:$0xff] %v2628
        %v2631 = vld [vmem:[%s9] sm:$0xff]
        %v2632 = vadd.f32 %v2613, %v2614
        %2633 = vadd.xlane.f32.xlu0 %v2632
        %v2634 = vpop.xlane.xlu0 %2633
        %v2635 = vadd.f32 %v2631, %v2634
        %vm2636 = vcmask 7168
        %2637 = vst.msk [vmem:[%s9] sm:$0xff] %vm2636, %v2635
        // Predicated region
        $region89: #{realnvp_forward.1} parent=51 // pred_check
          %p2638 = pneg %p251
        $region90: #{realnvp_forward.1} parent=51 // pred_check_branch
          %2640 = sbr.rel (%p2638) target = $region92
        $region91: #{realnvp_forward.1} parent=51 // pred_region
          %2642 = vsyncadd [#allocation4], 0
          %s2644 = sshll.u32 [#allocation16], 4
          %s2645 = int_to_ptr.vmem [resolvable:$true] %s2644
          %s2646 = sshll.u32 %s8, 4
          %s2647 = int_to_ptr.hbm [resolvable:$true] %s2646
          %2649 = dma.vmem_to_hbm [thread:$0]  %s2645, 256, %s2647, [#allocation4]
        $region92: #{realnvp_forward.1} parent=51 // pred_fallthru
          _
        // Predicated region
        $region93: #{realnvp_forward.1} parent=51 // pred_check
          %p2650 = pneg %p272
        $region94: #{realnvp_forward.1} parent=51 // pred_check_branch
          %2652 = sbr.rel (%p2650) target = $region96
        $region95: #{realnvp_forward.1} parent=51 // pred_region
          _
        $region96: #{realnvp_forward.1} parent=51 // pred_fallthru
          _
        // Predicated region
        $region97: #{realnvp_forward.1} parent=51 // pred_check
          %p2653 = pneg %p251
        $region98: #{realnvp_forward.1} parent=51 // pred_check_branch
          %2655 = sbr.rel (%p2653) target = $region100
        $region99: #{realnvp_forward.1} parent=51 // pred_region
          %2657 = dma.done [#allocation4], 256
        $region100: #{realnvp_forward.1} parent=51 // pred_fallthru
          _
        // Predicated region
        $region101: #{realnvp_forward.1} parent=51 // pred_check
          %p2658 = pneg %p272
        $region102: #{realnvp_forward.1} parent=51 // pred_check_branch
          %2660 = sbr.rel (%p2658) target = $region104
        $region103: #{realnvp_forward.1} parent=51 // pred_region
          _
        $region104: #{realnvp_forward.1} parent=51 // pred_fallthru
          _
      $region52: #{realnvp_forward.1} parent=5 // pred_fallthru
        _
      %p2661 = scmp.le.s32.totalorder 2, %s30
      // Predicated region
      $region105: #{realnvp_forward.1} parent=5 // pred_check
        %p2662 = pneg %p2661
      $region106: #{realnvp_forward.1} parent=5 // pred_check_branch
        %2664 = sbr.rel (%p2662) target = $region108
      $region107: #{realnvp_forward.1} parent=5 // pred_region
        %s2665 = ssub.s32 %s30, 2
      $region108: #{realnvp_forward.1} parent=5 // pred_fallthru
        _
    $region6: #{realnvp_forward.1} parent=1 // loop_footer
      %s34 = sadd.s32 1, %s30
    $region7: #{realnvp_forward.1} parent=1 // loop_footer_branch
      %29 = sbr.rel target = $region3
    $region8: #{realnvp_forward.1} parent=1 // loop_exit
      _
    %2666 = vsyncpa [#allocation3], 1
    %s2667 = scalar_lea.sflag [#allocation3], 1
    %2668 = vsyncpa %s2667, 1
    %2669 = vsyncpa [#allocation6], 1
    %s2670 = scalar_lea.sflag [#allocation6], 1
    %2671 = vsyncpa %s2670, 1
    %2672 = vsyncpa [#allocation9], 1
    %s2673 = scalar_lea.sflag [#allocation9], 1
    %2674 = vsyncpa %s2673, 1
    %2675 = vsyncpa [#allocation12], 1
    %s2676 = scalar_lea.sflag [#allocation12], 1
    %2677 = vsyncpa %s2676, 1
    %2678 = vsyncpa [#allocation15], 1
    %s2679 = scalar_lea.sflag [#allocation15], 1
    %2680 = vsyncpa %s2679, 1
    %2681 = vsyncpa [#allocation4], 1
    %s2682 = scalar_lea.sflag [#allocation4], 1
    %2683 = vsyncpa %s2682, 1

</llo_original>
